<compile_context>
chip_gen: v7x
topology: tpu7x:2x2x1
jax: 0.10.0
libtpu: 0.0.40
codegen_flags: <defaults>
</compile_context>

<pallas_src>
import functools

import jax
import jax.numpy as jnp
from jax.experimental import pallas as pl
from jax.experimental.pallas import tpu as pltpu


FEATS = [2, 16, 32, 48, 64, 96, 128]      # GCNConv feature chain
LIN1 = (128, 64)
LIN2 = (64, 10)
FP = 128                                  # lane-dense padded feature width
NUM_CLASSES = 10
NEG_BIG = -3.0e38                         # "-inf" stand-in for the masked max

_VMEM = pl.BlockSpec(memory_space=pltpu.MemorySpace.VMEM)


def _round_up(x, m):
    return (x + m - 1) // m * m


# ----------------------------------------------------------------------------
# The single fused Pallas kernel
# ----------------------------------------------------------------------------
def _gcn_fused_kernel(a_ref, x_ref, seg_ref, *refs):
    """Entire GCN forward; all intermediates live in VMEM.

    a_ref   : (NP, NP)  normalized dense adjacency  D^-1/2 (A + I) D^-1/2
    x_ref   : (NP, FP)  node features, zero padded to FP lanes
    seg_ref : (NP, G)   graph-membership mask (1.0 member / 0.0 not)
    refs    : w1,b1,...,w6,b6, lw1,lb1,lw2,lb2, o_ref
    """
    o_ref = refs[-1]
    p_refs = refs[:-1]
    conv_refs = p_refs[:12]
    lw1, lb1, lw2, lb2 = p_refs[12:]

    a = a_ref[...]
    h = x_ref[...]

    # 6 x (GCNConv + ReLU):  h = relu( A_hat @ (h @ W) + b )
    for l in range(6):
        w = conv_refs[2 * l][...]
        b = conv_refs[2 * l + 1][...]
        xw = jnp.dot(h, w, preferred_element_type=jnp.float32)
        h = jnp.dot(a, xw, preferred_element_type=jnp.float32) + b
        h = jnp.maximum(h, 0.0)

    # scatter_max over nodes of each graph, then linear1 -> ReLU -> linear2,
    # writing one output row per graph (G is tiny and static -> unrolled).
    n_graphs = seg_ref.shape[1]
    for g in range(n_graphs):
        member = seg_ref[:, g:g + 1] > 0.5                                  # (NP, 1)
        pooled = jnp.max(jnp.where(member, h, NEG_BIG),
                         axis=0, keepdims=True)                             # (1, FP)
        y = jnp.dot(pooled, lw1[...], preferred_element_type=jnp.float32) + lb1[...]
        y = jnp.maximum(y, 0.0)
        y = jnp.dot(y, lw2[...], preferred_element_type=jnp.float32) + lb2[...]
        o_ref[g:g + 1, :] = y


# ----------------------------------------------------------------------------
# Plain-JAX glue: dense normalized adjacency + membership mask (data-dependent)
# ----------------------------------------------------------------------------
def build_graph_operands(x, edge_index, batch, num_graphs):
    n = x.shape[0]
    n_pad = max(_round_up(n, 8), 8)

    # Dense adjacency with self loops; row = destination, col = source.
    src, dst = edge_index[0], edge_index[1]
    a = jnp.zeros((n_pad, n_pad), jnp.float32)
    a = a.at[dst, src].add(1.0)
    node_ids = jnp.arange(n)
    a = a.at[node_ids, node_ids].add(1.0)

    # Symmetric normalization (PyG gcn_norm): deg = in-degree incl. self loop.
    deg = jnp.sum(a, axis=1)
    dinv = jnp.where(deg > 0, jax.lax.rsqrt(deg), 0.0)
    a_hat = a * dinv[:, None] * dinv[None, :]

    x_pad = jnp.zeros((n_pad, FP), jnp.float32).at[:n, :x.shape[1]].set(
        x.astype(jnp.float32))

    batch_pad = jnp.full((n_pad,), -1, jnp.int32).at[:n].set(batch.astype(jnp.int32))
    seg = (batch_pad[:, None]
           == jnp.arange(num_graphs, dtype=jnp.int32)[None, :]).astype(jnp.float32)
    return a_hat, x_pad, seg


# ----------------------------------------------------------------------------
# Parameters: padded + pre-transposed once at init (no per-call reshapes)
# ----------------------------------------------------------------------------
def init_params(key):
    dims = list(zip(FEATS[:-1], FEATS[1:])) + [LIN1, LIN2]
    keys = jax.random.split(key, 2 * len(dims))
    params = []
    for i, (fin, fout) in enumerate(dims):
        bound = 1.0 / jnp.sqrt(jnp.float32(fin))
        w = jax.random.uniform(keys[2 * i], (fin, fout), jnp.float32, -bound, bound)
        b = jax.random.uniform(keys[2 * i + 1], (fout,), jnp.float32, -bound, bound)
        w_pad = jnp.zeros((FP, FP), jnp.float32).at[:fin, :fout].set(w)
        b_pad = jnp.zeros((1, FP), jnp.float32).at[0, :fout].set(b)
        params.append(w_pad)
        params.append(b_pad)
    return params   # [w1,b1,...,w6,b6, lw1,lb1, lw2,lb2]


# ----------------------------------------------------------------------------
# Forward pass (matches GCN.forward semantics)
# ----------------------------------------------------------------------------
@functools.partial(jax.jit, static_argnames=("num_graphs",))
def gcn_forward(x, edge_index, batch, params, *, num_graphs):
    a_hat, x_pad, seg = build_graph_operands(x, edge_index, batch, num_graphs)
    out_pad = pl.pallas_call(
        _gcn_fused_kernel,
        out_shape=jax.ShapeDtypeStruct((num_graphs, FP), jnp.float32),
        in_specs=[_VMEM] * (3 + len(params)),
        out_specs=_VMEM,
    )(a_hat, x_pad, seg, *params)
    return out_pad[:, :NUM_CLASSES]


def gcn_forward_ref(x, edge_index, batch, params, num_graphs):
    """Pure-JAX reference (same padded math) for correctness checking."""
    hi = jax.lax.Precision.HIGHEST
    a_hat, x_pad, seg = build_graph_operands(x, edge_index, batch, num_graphs)
    h = x_pad
    for l in range(6):
        w, b = params[2 * l], params[2 * l + 1]
        h = jnp.maximum(jnp.dot(a_hat, jnp.dot(h, w, precision=hi), precision=hi) + b, 0.0)
    member = seg.T[:, :, None] > 0.5                                   # (G, NP, 1)
    pooled = jnp.max(jnp.where(member, h[None, :, :], NEG_BIG), axis=1)  # (G, FP)
    y = jnp.maximum(jnp.dot(pooled, params[12], precision=hi) + params[13], 0.0)
    y = jnp.dot(y, params[14], precision=hi) + params[15]
    return y[:, :NUM_CLASSES]


if __name__ == "__main__":
    key = jax.random.PRNGKey(0)
    k_x, k_p = jax.random.split(key)

    # Two small graphs batched together: 16 nodes, 2 input features per node.
    num_nodes, num_graphs = 16, 2
    x = jax.random.normal(k_x, (num_nodes, 2), dtype=jnp.float32)

    def ring_edges(lo, hi):
        nodes = list(range(lo, hi))
        e = []
        for i, u in enumerate(nodes):
            v = nodes[(i + 1) % len(nodes)]
            e.append((u, v))
            e.append((v, u))
        return e

    edges = ring_edges(0, 8) + ring_edges(8, 16) + [(0, 4), (4, 0), (8, 13), (13, 8)]
    edge_index = jnp.array(edges, dtype=jnp.int32).T        # (2, E)
    batch = jnp.array([0] * 8 + [1] * 8, dtype=jnp.int32)   # graph id per node

    params = init_params(k_p)

    out = gcn_forward(x, edge_index, batch, params, num_graphs=num_graphs)
    out = jax.block_until_ready(out)
    assert out.shape == (num_graphs, NUM_CLASSES), out.shape
    assert bool(jnp.all(jnp.isfinite(out)))

    ref = gcn_forward_ref(x, edge_index, batch, params, num_graphs)
    assert jnp.allclose(out, ref, atol=1e-3, rtol=1e-3), (out, ref)

    print("KERNEL_OK")
</pallas_src>

<mosaic_0001>
module attributes {stable_mosaic.version = 11 : i64} {
  func.func private @main(%arg0: i32) attributes {dimension_semantics = [#tpu.dimension_semantics<core_parallel>], iteration_bounds = array<i64: 2>, tpu.core_type = #tpu.core_type<sc_scalar_subcore>, window_params = []} {
    return
  }
}

module attributes {stable_mosaic.version = 11 : i64} {
  func.func private @main(%arg0: i32) attributes {dimension_semantics = [#tpu.dimension_semantics<core_parallel>], iteration_bounds = array<i64: 2>, tpu.core_type = #tpu.core_type<sc_scalar_subcore>, window_params = []} {
    return
  }
}

module attributes {stable_mosaic.version = 11 : i64} {
  func.func @_gcn_fused_kernel(%arg0: memref<16x16xf32, #tpu.memory_space<vmem>>, %arg1: memref<16x128xf32, #tpu.memory_space<vmem>>, %arg2: memref<16x2xf32, #tpu.memory_space<vmem>>, %arg3: memref<128x128xf32, #tpu.memory_space<vmem>>, %arg4: memref<1x128xf32, #tpu.memory_space<vmem>>, %arg5: memref<128x128xf32, #tpu.memory_space<vmem>>, %arg6: memref<1x128xf32, #tpu.memory_space<vmem>>, %arg7: memref<128x128xf32, #tpu.memory_space<vmem>>, %arg8: memref<1x128xf32, #tpu.memory_space<vmem>>, %arg9: memref<128x128xf32, #tpu.memory_space<vmem>>, %arg10: memref<1x128xf32, #tpu.memory_space<vmem>>, %arg11: memref<128x128xf32, #tpu.memory_space<vmem>>, %arg12: memref<1x128xf32, #tpu.memory_space<vmem>>, %arg13: memref<128x128xf32, #tpu.memory_space<vmem>>, %arg14: memref<1x128xf32, #tpu.memory_space<vmem>>, %arg15: memref<128x128xf32, #tpu.memory_space<vmem>>, %arg16: memref<1x128xf32, #tpu.memory_space<vmem>>, %arg17: memref<128x128xf32, #tpu.memory_space<vmem>>, %arg18: memref<1x128xf32, #tpu.memory_space<vmem>>, %arg19: memref<2x128xf32, #tpu.memory_space<vmem>>) attributes {dimension_semantics = [], scalar_prefetch = 0 : i64, scratch_operands = 0 : i64, tpu.core_type = #tpu.core_type<tc>} {
    %c0 = arith.constant 0 : index
    %c0_0 = arith.constant 0 : index
    %0 = vector.load %arg0[%c0, %c0_0] : memref<16x16xf32, #tpu.memory_space<vmem>>, vector<16x16xf32>
    %c0_1 = arith.constant 0 : index
    %c0_2 = arith.constant 0 : index
    %1 = vector.load %arg1[%c0_1, %c0_2] : memref<16x128xf32, #tpu.memory_space<vmem>>, vector<16x128xf32>
    %c0_3 = arith.constant 0 : index
    %c0_4 = arith.constant 0 : index
    %2 = vector.load %arg3[%c0_3, %c0_4] : memref<128x128xf32, #tpu.memory_space<vmem>>, vector<128x128xf32>
    %c0_5 = arith.constant 0 : index
    %c0_6 = arith.constant 0 : index
    %3 = vector.load %arg4[%c0_5, %c0_6] : memref<1x128xf32, #tpu.memory_space<vmem>>, vector<1x128xf32>
    %cst = arith.constant dense<0.000000e+00> : vector<16x128xf32>
    %4 = tpu.matmul %1, %2, %cst {dimension_numbers = #tpu.dot_dimension_numbers<[1], [0], [0], [1], [0, 0, 1, 1], [], []>} : vector<16x128xf32>, vector<128x128xf32>, vector<16x128xf32> -> vector<16x128xf32>
    %cst_7 = arith.constant dense<0.000000e+00> : vector<16x128xf32>
    %5 = tpu.matmul %0, %4, %cst_7 {dimension_numbers = #tpu.dot_dimension_numbers<[1], [0], [0], [1], [0, 0, 1, 1], [], []>} : vector<16x16xf32>, vector<16x128xf32>, vector<16x128xf32> -> vector<16x128xf32>
    %6 = vector.broadcast %3 : vector<1x128xf32> to vector<16x128xf32>
    %7 = arith.addf %5, %6 : vector<16x128xf32>
    %cst_8 = arith.constant 0.000000e+00 : f32
    %8 = vector.broadcast %cst_8 : f32 to vector<16x128xf32>
    %9 = arith.maximumf %7, %8 : vector<16x128xf32>
    %c0_9 = arith.constant 0 : index
    %c0_10 = arith.constant 0 : index
    %10 = vector.load %arg5[%c0_9, %c0_10] : memref<128x128xf32, #tpu.memory_space<vmem>>, vector<128x128xf32>
    %c0_11 = arith.constant 0 : index
    %c0_12 = arith.constant 0 : index
    %11 = vector.load %arg6[%c0_11, %c0_12] : memref<1x128xf32, #tpu.memory_space<vmem>>, vector<1x128xf32>
    %cst_13 = arith.constant dense<0.000000e+00> : vector<16x128xf32>
    %12 = tpu.matmul %9, %10, %cst_13 {dimension_numbers = #tpu.dot_dimension_numbers<[1], [0], [0], [1], [0, 0, 1, 1], [], []>} : vector<16x128xf32>, vector<128x128xf32>, vector<16x128xf32> -> vector<16x128xf32>
    %cst_14 = arith.constant dense<0.000000e+00> : vector<16x128xf32>
    %13 = tpu.matmul %0, %12, %cst_14 {dimension_numbers = #tpu.dot_dimension_numbers<[1], [0], [0], [1], [0, 0, 1, 1], [], []>} : vector<16x16xf32>, vector<16x128xf32>, vector<16x128xf32> -> vector<16x128xf32>
    %14 = vector.broadcast %11 : vector<1x128xf32> to vector<16x128xf32>
    %15 = arith.addf %13, %14 : vector<16x128xf32>
    %cst_15 = arith.constant 0.000000e+00 : f32
    %16 = vector.broadcast %cst_15 : f32 to vector<16x128xf32>
    %17 = arith.maximumf %15, %16 : vector<16x128xf32>
    %c0_16 = arith.constant 0 : index
    %c0_17 = arith.constant 0 : index
    %18 = vector.load %arg7[%c0_16, %c0_17] : memref<128x128xf32, #tpu.memory_space<vmem>>, vector<128x128xf32>
    %c0_18 = arith.constant 0 : index
    %c0_19 = arith.constant 0 : index
    %19 = vector.load %arg8[%c0_18, %c0_19] : memref<1x128xf32, #tpu.memory_space<vmem>>, vector<1x128xf32>
    %cst_20 = arith.constant dense<0.000000e+00> : vector<16x128xf32>
    %20 = tpu.matmul %17, %18, %cst_20 {dimension_numbers = #tpu.dot_dimension_numbers<[1], [0], [0], [1], [0, 0, 1, 1], [], []>} : vector<16x128xf32>, vector<128x128xf32>, vector<16x128xf32> -> vector<16x128xf32>
    %cst_21 = arith.constant dense<0.000000e+00> : vector<16x128xf32>
    %21 = tpu.matmul %0, %20, %cst_21 {dimension_numbers = #tpu.dot_dimension_numbers<[1], [0], [0], [1], [0, 0, 1, 1], [], []>} : vector<16x16xf32>, vector<16x128xf32>, vector<16x128xf32> -> vector<16x128xf32>
    %22 = vector.broadcast %19 : vector<1x128xf32> to vector<16x128xf32>
    %23 = arith.addf %21, %22 : vector<16x128xf32>
    %cst_22 = arith.constant 0.000000e+00 : f32
    %24 = vector.broadcast %cst_22 : f32 to vector<16x128xf32>
    %25 = arith.maximumf %23, %24 : vector<16x128xf32>
    %c0_23 = arith.constant 0 : index
    %c0_24 = arith.constant 0 : index
    %26 = vector.load %arg9[%c0_23, %c0_24] : memref<128x128xf32, #tpu.memory_space<vmem>>, vector<128x128xf32>
    %c0_25 = arith.constant 0 : index
    %c0_26 = arith.constant 0 : index
    %27 = vector.load %arg10[%c0_25, %c0_26] : memref<1x128xf32, #tpu.memory_space<vmem>>, vector<1x128xf32>
    %cst_27 = arith.constant dense<0.000000e+00> : vector<16x128xf32>
    %28 = tpu.matmul %25, %26, %cst_27 {dimension_numbers = #tpu.dot_dimension_numbers<[1], [0], [0], [1], [0, 0, 1, 1], [], []>} : vector<16x128xf32>, vector<128x128xf32>, vector<16x128xf32> -> vector<16x128xf32>
    %cst_28 = arith.constant dense<0.000000e+00> : vector<16x128xf32>
    %29 = tpu.matmul %0, %28, %cst_28 {dimension_numbers = #tpu.dot_dimension_numbers<[1], [0], [0], [1], [0, 0, 1, 1], [], []>} : vector<16x16xf32>, vector<16x128xf32>, vector<16x128xf32> -> vector<16x128xf32>
    %30 = vector.broadcast %27 : vector<1x128xf32> to vector<16x128xf32>
    %31 = arith.addf %29, %30 : vector<16x128xf32>
    %cst_29 = arith.constant 0.000000e+00 : f32
    %32 = vector.broadcast %cst_29 : f32 to vector<16x128xf32>
    %33 = arith.maximumf %31, %32 : vector<16x128xf32>
    %c0_30 = arith.constant 0 : index
    %c0_31 = arith.constant 0 : index
    %34 = vector.load %arg11[%c0_30, %c0_31] : memref<128x128xf32, #tpu.memory_space<vmem>>, vector<128x128xf32>
    %c0_32 = arith.constant 0 : index
    %c0_33 = arith.constant 0 : index
    %35 = vector.load %arg12[%c0_32, %c0_33] : memref<1x128xf32, #tpu.memory_space<vmem>>, vector<1x128xf32>
    %cst_34 = arith.constant dense<0.000000e+00> : vector<16x128xf32>
    %36 = tpu.matmul %33, %34, %cst_34 {dimension_numbers = #tpu.dot_dimension_numbers<[1], [0], [0], [1], [0, 0, 1, 1], [], []>} : vector<16x128xf32>, vector<128x128xf32>, vector<16x128xf32> -> vector<16x128xf32>
    %cst_35 = arith.constant dense<0.000000e+00> : vector<16x128xf32>
    %37 = tpu.matmul %0, %36, %cst_35 {dimension_numbers = #tpu.dot_dimension_numbers<[1], [0], [0], [1], [0, 0, 1, 1], [], []>} : vector<16x16xf32>, vector<16x128xf32>, vector<16x128xf32> -> vector<16x128xf32>
    %38 = vector.broadcast %35 : vector<1x128xf32> to vector<16x128xf32>
    %39 = arith.addf %37, %38 : vector<16x128xf32>
    %cst_36 = arith.constant 0.000000e+00 : f32
    %40 = vector.broadcast %cst_36 : f32 to vector<16x128xf32>
    %41 = arith.maximumf %39, %40 : vector<16x128xf32>
    %c0_37 = arith.constant 0 : index
    %c0_38 = arith.constant 0 : index
    %42 = vector.load %arg13[%c0_37, %c0_38] : memref<128x128xf32, #tpu.memory_space<vmem>>, vector<128x128xf32>
    %c0_39 = arith.constant 0 : index
    %c0_40 = arith.constant 0 : index
    %43 = vector.load %arg14[%c0_39, %c0_40] : memref<1x128xf32, #tpu.memory_space<vmem>>, vector<1x128xf32>
    %cst_41 = arith.constant dense<0.000000e+00> : vector<16x128xf32>
    %44 = tpu.matmul %41, %42, %cst_41 {dimension_numbers = #tpu.dot_dimension_numbers<[1], [0], [0], [1], [0, 0, 1, 1], [], []>} : vector<16x128xf32>, vector<128x128xf32>, vector<16x128xf32> -> vector<16x128xf32>
    %cst_42 = arith.constant dense<0.000000e+00> : vector<16x128xf32>
    %45 = tpu.matmul %0, %44, %cst_42 {dimension_numbers = #tpu.dot_dimension_numbers<[1], [0], [0], [1], [0, 0, 1, 1], [], []>} : vector<16x16xf32>, vector<16x128xf32>, vector<16x128xf32> -> vector<16x128xf32>
    %46 = vector.broadcast %43 : vector<1x128xf32> to vector<16x128xf32>
    %47 = arith.addf %45, %46 : vector<16x128xf32>
    %cst_43 = arith.constant 0.000000e+00 : f32
    %48 = vector.broadcast %cst_43 : f32 to vector<16x128xf32>
    %49 = arith.maximumf %47, %48 : vector<16x128xf32>
    %c0_44 = arith.constant 0 : index
    %c0_45 = arith.constant 0 : index
    %50 = vector.load %arg2[%c0_44, %c0_45] : memref<16x2xf32, #tpu.memory_space<vmem>>, vector<16x1xf32>
    %cst_46 = arith.constant 5.000000e-01 : f32
    %51 = vector.broadcast %cst_46 : f32 to vector<16x1xf32>
    %52 = arith.cmpf ogt, %50, %51 : vector<16x1xf32>
    %cst_47 = arith.constant -3.000000e+38 : f32
    %53 = vector.shape_cast %52 : vector<16x1xi1> to vector<16x1xi1>
    %54 = vector.broadcast %53 : vector<16x1xi1> to vector<16x128xi1>
    %55 = vector.broadcast %cst_47 : f32 to vector<16x128xf32>
    %56 = arith.select %54, %49, %55 : vector<16x128xi1>, vector<16x128xf32>
    %cst_48 = arith.constant dense<0xFF800000> : vector<128xf32>
    %57 = vector.multi_reduction <maximumf>, %56, %cst_48 [0] : vector<16x128xf32> to vector<128xf32>
    %58 = vector.shape_cast %57 : vector<128xf32> to vector<1x128xf32>
    %c0_49 = arith.constant 0 : index
    %c0_50 = arith.constant 0 : index
    %59 = vector.load %arg15[%c0_49, %c0_50] : memref<128x128xf32, #tpu.memory_space<vmem>>, vector<128x128xf32>
    %cst_51 = arith.constant dense<0.000000e+00> : vector<1x128xf32>
    %60 = tpu.matmul %58, %59, %cst_51 {dimension_numbers = #tpu.dot_dimension_numbers<[1], [0], [0], [1], [0, 0, 1, 1], [], []>} : vector<1x128xf32>, vector<128x128xf32>, vector<1x128xf32> -> vector<1x128xf32>
    %c0_52 = arith.constant 0 : index
    %c0_53 = arith.constant 0 : index
    %61 = vector.load %arg16[%c0_52, %c0_53] : memref<1x128xf32, #tpu.memory_space<vmem>>, vector<1x128xf32>
    %62 = arith.addf %60, %61 : vector<1x128xf32>
    %cst_54 = arith.constant 0.000000e+00 : f32
    %63 = vector.broadcast %cst_54 : f32 to vector<1x128xf32>
    %64 = arith.maximumf %62, %63 : vector<1x128xf32>
    %c0_55 = arith.constant 0 : index
    %c0_56 = arith.constant 0 : index
    %65 = vector.load %arg17[%c0_55, %c0_56] : memref<128x128xf32, #tpu.memory_space<vmem>>, vector<128x128xf32>
    %cst_57 = arith.constant dense<0.000000e+00> : vector<1x128xf32>
    %66 = tpu.matmul %64, %65, %cst_57 {dimension_numbers = #tpu.dot_dimension_numbers<[1], [0], [0], [1], [0, 0, 1, 1], [], []>} : vector<1x128xf32>, vector<128x128xf32>, vector<1x128xf32> -> vector<1x128xf32>
    %c0_58 = arith.constant 0 : index
    %c0_59 = arith.constant 0 : index
    %67 = vector.load %arg18[%c0_58, %c0_59] : memref<1x128xf32, #tpu.memory_space<vmem>>, vector<1x128xf32>
    %68 = arith.addf %66, %67 : vector<1x128xf32>
    %c0_60 = arith.constant 0 : index
    %c0_61 = arith.constant 0 : index
    %69 = vector.load %arg19[%c0_60, %c0_61] : memref<2x128xf32, #tpu.memory_space<vmem>>, vector<1x128xf32>
    tpu.vector_store %arg19[%c0_60, %c0_61], %68 {strides = array<i32>} : memref<2x128xf32, #tpu.memory_space<vmem>>, vector<1x128xf32>,
    %c0_62 = arith.constant 0 : index
    %c1 = arith.constant 1 : index
    %70 = vector.load %arg2[%c0_62, %c1] : memref<16x2xf32, #tpu.memory_space<vmem>>, vector<16x1xf32>
    %cst_63 = arith.constant 5.000000e-01 : f32
    %71 = vector.broadcast %cst_63 : f32 to vector<16x1xf32>
    %72 = arith.cmpf ogt, %70, %71 : vector<16x1xf32>
    %cst_64 = arith.constant -3.000000e+38 : f32
    %73 = vector.shape_cast %72 : vector<16x1xi1> to vector<16x1xi1>
    %74 = vector.broadcast %73 : vector<16x1xi1> to vector<16x128xi1>
    %75 = vector.broadcast %cst_64 : f32 to vector<16x128xf32>
    %76 = arith.select %74, %49, %75 : vector<16x128xi1>, vector<16x128xf32>
    %cst_65 = arith.constant dense<0xFF800000> : vector<128xf32>
    %77 = vector.multi_reduction <maximumf>, %76, %cst_65 [0] : vector<16x128xf32> to vector<128xf32>
    %78 = vector.shape_cast %77 : vector<128xf32> to vector<1x128xf32>
    %c0_66 = arith.constant 0 : index
    %c0_67 = arith.constant 0 : index
    %79 = vector.load %arg15[%c0_66, %c0_67] : memref<128x128xf32, #tpu.memory_space<vmem>>, vector<128x128xf32>
    %cst_68 = arith.constant dense<0.000000e+00> : vector<1x128xf32>
    %80 = tpu.matmul %78, %79, %cst_68 {dimension_numbers = #tpu.dot_dimension_numbers<[1], [0], [0], [1], [0, 0, 1, 1], [], []>} : vector<1x128xf32>, vector<128x128xf32>, vector<1x128xf32> -> vector<1x128xf32>
    %c0_69 = arith.constant 0 : index
    %c0_70 = arith.constant 0 : index
    %81 = vector.load %arg16[%c0_69, %c0_70] : memref<1x128xf32, #tpu.memory_space<vmem>>, vector<1x128xf32>
    %82 = arith.addf %80, %81 : vector<1x128xf32>
    %cst_71 = arith.constant 0.000000e+00 : f32
    %83 = vector.broadcast %cst_71 : f32 to vector<1x128xf32>
    %84 = arith.maximumf %82, %83 : vector<1x128xf32>
    %c0_72 = arith.constant 0 : index
    %c0_73 = arith.constant 0 : index
    %85 = vector.load %arg17[%c0_72, %c0_73] : memref<128x128xf32, #tpu.memory_space<vmem>>, vector<128x128xf32>
    %cst_74 = arith.constant dense<0.000000e+00> : vector<1x128xf32>
    %86 = tpu.matmul %84, %85, %cst_74 {dimension_numbers = #tpu.dot_dimension_numbers<[1], [0], [0], [1], [0, 0, 1, 1], [], []>} : vector<1x128xf32>, vector<128x128xf32>, vector<1x128xf32> -> vector<1x128xf32>
    %c0_75 = arith.constant 0 : index
    %c0_76 = arith.constant 0 : index
    %87 = vector.load %arg18[%c0_75, %c0_76] : memref<1x128xf32, #tpu.memory_space<vmem>>, vector<1x128xf32>
    %88 = arith.addf %86, %87 : vector<1x128xf32>
    %c1_77 = arith.constant 1 : index
    %c0_78 = arith.constant 0 : index
    %89 = vector.load %arg19[%c1_77, %c0_78] : memref<2x128xf32, #tpu.memory_space<vmem>>, vector<1x128xf32>
    tpu.vector_store %arg19[%c1_77, %c0_78], %88 {strides = array<i32>} : memref<2x128xf32, #tpu.memory_space<vmem>>, vector<1x128xf32>,
    return
  }
}

</mosaic_0001>

<llo_original>
// kernel: gcn_forward.1
$region0: #{gcn_forward.1}
  #allocation0 [shape = 'u32[]', space=smem, size = 0x4, offset = 0x4, fixed_abs, tag = 'smem constant byte address 0x4 - core index']
  #allocation1 [shape = 'u32[144,128]{1,0:T(1,128)}', space=vmem, size = 0x12000, scoped, tag = 'internal scratch']
  %s0 = inlined_call_operand.vmem [shape: f32[16,16], index: 0, kind: input, shape index: {}]
  %s1 = inlined_call_operand.vmem [shape: f32[16,128], index: 1, kind: input, shape index: {}]
  %s2 = inlined_call_operand.vmem [shape: f32[16,2], index: 2, kind: input, shape index: {}]
  %s3 = inlined_call_operand.vmem [shape: f32[128,128], index: 3, kind: input, shape index: {}]
  %s4 = inlined_call_operand.vmem [shape: f32[1,128], index: 4, kind: input, shape index: {}]
  %s5 = inlined_call_operand.vmem [shape: f32[128,128], index: 5, kind: input, shape index: {}]
  %s6 = inlined_call_operand.vmem [shape: f32[1,128], index: 6, kind: input, shape index: {}]
  %s7 = inlined_call_operand.vmem [shape: f32[128,128], index: 7, kind: input, shape index: {}]
  %s8 = inlined_call_operand.vmem [shape: f32[1,128], index: 8, kind: input, shape index: {}]
  %s9 = inlined_call_operand.vmem [shape: f32[128,128], index: 9, kind: input, shape index: {}]
  %s10 = inlined_call_operand.vmem [shape: f32[1,128], index: 10, kind: input, shape index: {}]
  %s11 = inlined_call_operand.vmem [shape: f32[128,128], index: 11, kind: input, shape index: {}]
  %s12 = inlined_call_operand.vmem [shape: f32[1,128], index: 12, kind: input, shape index: {}]
  %s13 = inlined_call_operand.vmem [shape: f32[128,128], index: 13, kind: input, shape index: {}]
  %s14 = inlined_call_operand.vmem [shape: f32[1,128], index: 14, kind: input, shape index: {}]
  %s15 = inlined_call_operand.vmem [shape: f32[128,128], index: 15, kind: input, shape index: {}]
  %s16 = inlined_call_operand.vmem [shape: f32[1,128], index: 16, kind: input, shape index: {}]
  %s17 = inlined_call_operand.vmem [shape: f32[128,128], index: 17, kind: input, shape index: {}]
  %s18 = inlined_call_operand.vmem [shape: f32[1,128], index: 18, kind: input, shape index: {}]
  %s19 = inlined_call_operand.hbm [shape: f32[2,128], index: 19, kind: output, shape index: {}]
  %s20 = sld [smem:[#allocation0]]
  $region86: #{gcn_forward.1} parent=0
    _
  %s22 = ssub.s32 1, %s20
  %s23 = scalar_select 0, %s22, %s20
  $region1: #{gcn_forward.1} parent=0
    #allocation2 [shape = 'u8[1024]{0}', space=vmem, size = 0x400, scoped, tag = 'output window, operand 0, single buffered']
    #allocation3 [shape = 's32[1]{0}', space=sflag, size = 0x4, scoped, tag = 'scoped memory for gcn_forward.1']
    %24 = vsyncpa [#allocation3], 0
    // Predicated region
    $region2: #{gcn_forward.1} parent=1 // pred_check
      _
    $region3: #{gcn_forward.1} parent=1 // pred_check_branch
      %26 = sbr.rel (0) target = $region5
    $region4: #{gcn_forward.1} parent=1 // pred_region
      _
    $region5: #{gcn_forward.1} parent=1 // pred_fallthru
      _
    // Predicated region
    $region6: #{gcn_forward.1} parent=1 // pred_check
      _
    $region7: #{gcn_forward.1} parent=1 // pred_check_branch
      %28 = sbr.rel (0) target = $region9
    $region8: #{gcn_forward.1} parent=1 // pred_region
      _
    $region9: #{gcn_forward.1} parent=1 // pred_fallthru
      _
    // Predicated region
    $region10: #{gcn_forward.1} parent=1 // pred_check
      _
    $region11: #{gcn_forward.1} parent=1 // pred_check_branch
      %30 = sbr.rel (0) target = $region13
    $region12: #{gcn_forward.1} parent=1 // pred_region
      _
    $region13: #{gcn_forward.1} parent=1 // pred_fallthru
      _
    // Predicated region
    $region14: #{gcn_forward.1} parent=1 // pred_check
      _
    $region15: #{gcn_forward.1} parent=1 // pred_check_branch
      %32 = sbr.rel (0) target = $region17
    $region16: #{gcn_forward.1} parent=1 // pred_region
      _
    $region17: #{gcn_forward.1} parent=1 // pred_fallthru
      _
    // Predicated region
    $region18: #{gcn_forward.1} parent=1 // pred_check
      _
    $region19: #{gcn_forward.1} parent=1 // pred_check_branch
      %34 = sbr.rel (0) target = $region21
    $region20: #{gcn_forward.1} parent=1 // pred_region
      _
    $region21: #{gcn_forward.1} parent=1 // pred_fallthru
      _
    // Predicated region
    $region22: #{gcn_forward.1} parent=1 // pred_check
      _
    $region23: #{gcn_forward.1} parent=1 // pred_check_branch
      %36 = sbr.rel (0) target = $region25
    $region24: #{gcn_forward.1} parent=1 // pred_region
      _
    $region25: #{gcn_forward.1} parent=1 // pred_fallthru
      _
    // Predicated region
    $region26: #{gcn_forward.1} parent=1 // pred_check
      _
    $region27: #{gcn_forward.1} parent=1 // pred_check_branch
      %38 = sbr.rel (0) target = $region29
    $region28: #{gcn_forward.1} parent=1 // pred_region
      _
    $region29: #{gcn_forward.1} parent=1 // pred_fallthru
      _
    // Predicated region
    $region30: #{gcn_forward.1} parent=1 // pred_check
      _
    $region31: #{gcn_forward.1} parent=1 // pred_check_branch
      %40 = sbr.rel (0) target = $region33
    $region32: #{gcn_forward.1} parent=1 // pred_region
      _
    $region33: #{gcn_forward.1} parent=1 // pred_fallthru
      _
    // Predicated region
    $region34: #{gcn_forward.1} parent=1 // pred_check
      _
    $region35: #{gcn_forward.1} parent=1 // pred_check_branch
      %42 = sbr.rel (0) target = $region37
    $region36: #{gcn_forward.1} parent=1 // pred_region
      _
    $region37: #{gcn_forward.1} parent=1 // pred_fallthru
      _
    // Predicated region
    $region38: #{gcn_forward.1} parent=1 // pred_check
      _
    $region39: #{gcn_forward.1} parent=1 // pred_check_branch
      %44 = sbr.rel (0) target = $region41
    $region40: #{gcn_forward.1} parent=1 // pred_region
      _
    $region41: #{gcn_forward.1} parent=1 // pred_fallthru
      _
    // Predicated region
    $region42: #{gcn_forward.1} parent=1 // pred_check
      _
    $region43: #{gcn_forward.1} parent=1 // pred_check_branch
      %46 = sbr.rel (0) target = $region45
    $region44: #{gcn_forward.1} parent=1 // pred_region
      _
    $region45: #{gcn_forward.1} parent=1 // pred_fallthru
      _
    // Predicated region
    $region46: #{gcn_forward.1} parent=1 // pred_check
      _
    $region47: #{gcn_forward.1} parent=1 // pred_check_branch
      %48 = sbr.rel (0) target = $region49
    $region48: #{gcn_forward.1} parent=1 // pred_region
      _
    $region49: #{gcn_forward.1} parent=1 // pred_fallthru
      _
    // Predicated region
    $region50: #{gcn_forward.1} parent=1 // pred_check
      _
    $region51: #{gcn_forward.1} parent=1 // pred_check_branch
      %50 = sbr.rel (0) target = $region53
    $region52: #{gcn_forward.1} parent=1 // pred_region
      _
    $region53: #{gcn_forward.1} parent=1 // pred_fallthru
      _
    // Predicated region
    $region54: #{gcn_forward.1} parent=1 // pred_check
      _
    $region55: #{gcn_forward.1} parent=1 // pred_check_branch
      %52 = sbr.rel (0) target = $region57
    $region56: #{gcn_forward.1} parent=1 // pred_region
      _
    $region57: #{gcn_forward.1} parent=1 // pred_fallthru
      _
    // Predicated region
    $region58: #{gcn_forward.1} parent=1 // pred_check
      _
    $region59: #{gcn_forward.1} parent=1 // pred_check_branch
      %54 = sbr.rel (0) target = $region61
    $region60: #{gcn_forward.1} parent=1 // pred_region
      _
    $region61: #{gcn_forward.1} parent=1 // pred_fallthru
      _
    // Predicated region
    $region62: #{gcn_forward.1} parent=1 // pred_check
      _
    $region63: #{gcn_forward.1} parent=1 // pred_check_branch
      %56 = sbr.rel (0) target = $region65
    $region64: #{gcn_forward.1} parent=1 // pred_region
      _
    $region65: #{gcn_forward.1} parent=1 // pred_fallthru
      _
    // Predicated region
    $region66: #{gcn_forward.1} parent=1 // pred_check
      _
    $region67: #{gcn_forward.1} parent=1 // pred_check_branch
      %58 = sbr.rel (0) target = $region69
    $region68: #{gcn_forward.1} parent=1 // pred_region
      _
    $region69: #{gcn_forward.1} parent=1 // pred_fallthru
      _
    // Predicated region
    $region70: #{gcn_forward.1} parent=1 // pred_check
      _
    $region71: #{gcn_forward.1} parent=1 // pred_check_branch
      %60 = sbr.rel (0) target = $region73
    $region72: #{gcn_forward.1} parent=1 // pred_region
      _
    $region73: #{gcn_forward.1} parent=1 // pred_fallthru
      _
    // Predicated region
    $region74: #{gcn_forward.1} parent=1 // pred_check
      _
    $region75: #{gcn_forward.1} parent=1 // pred_check_branch
      %62 = sbr.rel (0) target = $region77
    $region76: #{gcn_forward.1} parent=1 // pred_region
      _
    $region77: #{gcn_forward.1} parent=1 // pred_fallthru
      _
    %v63 = vld [vmem:[%s0] sm:$0xff]
    %v64 = vld [vmem:[%s0 + $0x8] sm:$0xff]
    %v65 = vld [vmem:[%s1] sm:$0xff]
    %v66 = vld [vmem:[%s1 + $0x8] sm:$0xff]
    %v67 = vld [vmem:[%s3] sm:$0xff]
    %v68 = vld [vmem:[%s3 + $0x8] sm:$0xff]
    %v69 = vld [vmem:[%s3 + $0x10] sm:$0xff]
    %v70 = vld [vmem:[%s3 + $0x18] sm:$0xff]
    %v71 = vld [vmem:[%s3 + $0x20] sm:$0xff]
    %v72 = vld [vmem:[%s3 + $0x28] sm:$0xff]
    %v73 = vld [vmem:[%s3 + $0x30] sm:$0xff]
    %v74 = vld [vmem:[%s3 + $0x38] sm:$0xff]
    %v75 = vld [vmem:[%s3 + $0x40] sm:$0xff]
    %v76 = vld [vmem:[%s3 + $0x48] sm:$0xff]
    %v77 = vld [vmem:[%s3 + $0x50] sm:$0xff]
    %v78 = vld [vmem:[%s3 + $0x58] sm:$0xff]
    %v79 = vld [vmem:[%s3 + $0x60] sm:$0xff]
    %v80 = vld [vmem:[%s3 + $0x68] sm:$0xff]
    %v81 = vld [vmem:[%s3 + $0x70] sm:$0xff]
    %v82 = vld [vmem:[%s3 + $0x78] sm:$0xff]
    %v83 = vld [vmem:[%s4] sm:$0x1]
    %84 = vmatprep.subr.mxu0 0.0
    %85 = vmatpush1.msra.mxu0 %v67
    %86 = vmatprep.subr.mxu0 0.0
    %87 = vmatpush1.msra.mxu0 %v68
    %88 = vmatprep.subr.mxu0 0.0
    %89 = vmatpush1.msra.mxu0 %v69
    %90 = vmatprep.subr.mxu0 0.0
    %91 = vmatpush1.msra.mxu0 %v70
    %92 = vmatprep.subr.mxu0 0.0
    %93 = vmatpush1.msra.mxu0 %v71
    %94 = vmatprep.subr.mxu0 0.0
    %95 = vmatpush1.msra.mxu0 %v72
    %96 = vmatprep.subr.mxu0 0.0
    %97 = vmatpush1.msra.mxu0 %v73
    %98 = vmatprep.subr.mxu0 0.0
    %99 = vmatpush1.msra.mxu0 %v74
    %100 = vmatprep.subr.mxu0 0.0
    %101 = vmatpush1.msra.mxu0 %v75
    %102 = vmatprep.subr.mxu0 0.0
    %103 = vmatpush1.msra.mxu0 %v76
    %104 = vmatprep.subr.mxu0 0.0
    %105 = vmatpush1.msra.mxu0 %v77
    %106 = vmatprep.subr.mxu0 0.0
    %107 = vmatpush1.msra.mxu0 %v78
    %108 = vmatprep.subr.mxu0 0.0
    %109 = vmatpush1.msra.mxu0 %v79
    %110 = vmatprep.subr.mxu0 0.0
    %111 = vmatpush1.msra.mxu0 %v80
    %112 = vmatprep.subr.mxu0 0.0
    %113 = vmatpush1.msra.mxu0 %v81
    %114 = vmatprep.subr.mxu0 0.0
    %115 = vmatpush1.msra.mxu0 %v82
    %116 = vmatprep.subr.mxu0 0.0
    %117 = vmatpush1.msra.mxu0 0.0
    %118 = vmatprep.subr.mxu0 0.0
    %119 = vmatpush1.msra.mxu0 0.0
    %120 = vmatprep.subr.mxu0 0.0
    %121 = vmatpush1.msra.mxu0 0.0
    %122 = vmatprep.subr.mxu0 0.0
    %123 = vmatpush1.msra.mxu0 0.0
    %124 = vmatprep.subr.mxu0 0.0
    %125 = vmatpush1.msra.mxu0 0.0
    %126 = vmatprep.subr.mxu0 0.0
    %127 = vmatpush1.msra.mxu0 0.0
    %128 = vmatprep.subr.mxu0 0.0
    %129 = vmatpush1.msra.mxu0 0.0
    %130 = vmatprep.subr.mxu0 0.0
    %131 = vmatpush1.msra.mxu0 0.0
    %132 = vmatprep.subr.mxu0 0.0
    %133 = vmatpush1.msra.mxu0 0.0
    %134 = vmatprep.subr.mxu0 0.0
    %135 = vmatpush1.msra.mxu0 0.0
    %136 = vmatprep.subr.mxu0 0.0
    %137 = vmatpush1.msra.mxu0 0.0
    %138 = vmatprep.subr.mxu0 0.0
    %139 = vmatpush1.msra.mxu0 0.0
    %140 = vmatprep.subr.mxu0 0.0
    %141 = vmatpush1.msra.mxu0 0.0
    %142 = vmatprep.subr.mxu0 0.0
    %143 = vmatpush1.msra.mxu0 0.0
    %144 = vmatprep.subr.mxu0 0.0
    %145 = vmatpush1.msra.mxu0 0.0
    %146 = vmatprep.subr.mxu0 0.0
    %147 = vmatpush1.msra.mxu0 0.0
    %148 = vmatprep.mubr.f32.mxu0 0.0
    %149 = vmatmul.mubr.f32.gmra.mrb[0].mxu0 %v65
    %v150 = vpop.f32.mrb[0].mxu0
    %v151 = vadd.f32 0.0, %v150
    %v152 = vpop.f32.mrb[0].mxu0
    %153 = vmatprep.mubr.f32.mxu0 0.0
    %154 = vmatmul.mubr.f32.gmra.mrb[0].mxu0 %v66
    %v155 = vpop.f32.mrb[0].mxu0
    %v156 = vadd.f32 0.0, %v155
    %v157 = vpop.f32.mrb[0].mxu0
    %158 = vdwg.mxu0
    %v160 = vlaneseq
    %v161 = vshrl.u32 %v160, 7
    %v162 = vsub.s32 0, %v161
    %v163 = vrot.slane %v83, %v162
    %vm165 = vcmask 130048
    %v167 = vsel %vm165, %v63, 0
    %v170 = vsel %vm165, %v64, 0
    %172 = vmatprep.subr.mxu0 0.0
    %173 = vmatpush1.msra.mxu0 %v151
    %174 = vmatprep.subr.mxu0 0.0
    %175 = vmatpush1.msra.mxu0 %v156
    %176 = vmatprep.subr.mxu0 0.0
    %177 = vmatpush1.msra.mxu0 0.0
    %178 = vmatprep.subr.mxu0 0.0
    %179 = vmatpush1.msra.mxu0 0.0
    %180 = vmatprep.subr.mxu0 0.0
    %181 = vmatpush1.msra.mxu0 0.0
    %182 = vmatprep.subr.mxu0 0.0
    %183 = vmatpush1.msra.mxu0 0.0
    %184 = vmatprep.subr.mxu0 0.0
    %185 = vmatpush1.msra.mxu0 0.0
    %186 = vmatprep.subr.mxu0 0.0
    %187 = vmatpush1.msra.mxu0 0.0
    %188 = vmatprep.subr.mxu0 0.0
    %189 = vmatpush1.msra.mxu0 0.0
    %190 = vmatprep.subr.mxu0 0.0
    %191 = vmatpush1.msra.mxu0 0.0
    %192 = vmatprep.subr.mxu0 0.0
    %193 = vmatpush1.msra.mxu0 0.0
    %194 = vmatprep.subr.mxu0 0.0
    %195 = vmatpush1.msra.mxu0 0.0
    %196 = vmatprep.subr.mxu0 0.0
    %197 = vmatpush1.msra.mxu0 0.0
    %198 = vmatprep.subr.mxu0 0.0
    %199 = vmatpush1.msra.mxu0 0.0
    %200 = vmatprep.subr.mxu0 0.0
    %201 = vmatpush1.msra.mxu0 0.0
    %202 = vmatprep.subr.mxu0 0.0
    %203 = vmatpush1.msra.mxu0 0.0
    %204 = vmatprep.subr.mxu0 0.0
    %205 = vmatpush1.msra.mxu0 0.0
    %206 = vmatprep.subr.mxu0 0.0
    %207 = vmatpush1.msra.mxu0 0.0
    %208 = vmatprep.subr.mxu0 0.0
    %209 = vmatpush1.msra.mxu0 0.0
    %210 = vmatprep.subr.mxu0 0.0
    %211 = vmatpush1.msra.mxu0 0.0
    %212 = vmatprep.subr.mxu0 0.0
    %213 = vmatpush1.msra.mxu0 0.0
    %214 = vmatprep.subr.mxu0 0.0
    %215 = vmatpush1.msra.mxu0 0.0
    %216 = vmatprep.subr.mxu0 0.0
    %217 = vmatpush1.msra.mxu0 0.0
    %218 = vmatprep.subr.mxu0 0.0
    %219 = vmatpush1.msra.mxu0 0.0
    %220 = vmatprep.subr.mxu0 0.0
    %221 = vmatpush1.msra.mxu0 0.0
    %222 = vmatprep.subr.mxu0 0.0
    %223 = vmatpush1.msra.mxu0 0.0
    %224 = vmatprep.subr.mxu0 0.0
    %225 = vmatpush1.msra.mxu0 0.0
    %226 = vmatprep.subr.mxu0 0.0
    %227 = vmatpush1.msra.mxu0 0.0
    %228 = vmatprep.subr.mxu0 0.0
    %229 = vmatpush1.msra.mxu0 0.0
    %230 = vmatprep.subr.mxu0 0.0
    %231 = vmatpush1.msra.mxu0 0.0
    %232 = vmatprep.subr.mxu0 0.0
    %233 = vmatpush1.msra.mxu0 0.0
    %234 = vmatprep.subr.mxu0 0.0
    %235 = vmatpush1.msra.mxu0 0.0
    %236 = vmatprep.mubr.f32.mxu0 0.0
    %237 = vmatmul.mubr.f32.gmra.mrb[0].mxu0 %v167
    %v238 = vpop.f32.mrb[0].mxu0
    %v239 = vadd.f32 %v163, %v238
    %v240 = vpop.f32.mrb[0].mxu0
    %241 = vmatprep.mubr.f32.mxu0 0.0
    %242 = vmatmul.mubr.f32.gmra.mrb[0].mxu0 %v170
    %v243 = vpop.f32.mrb[0].mxu0
    %v244 = vadd.f32 %v163, %v243
    %v245 = vpop.f32.mrb[0].mxu0
    %246 = vdwg.mxu0
    %v247 = vmax.f32 %v239, 0.0
    %v248 = vmax.f32 %v244, 0.0
    %v249 = vld [vmem:[%s5] sm:$0xff]
    %v250 = vld [vmem:[%s5 + $0x8] sm:$0xff]
    %v251 = vld [vmem:[%s5 + $0x10] sm:$0xff]
    %v252 = vld [vmem:[%s5 + $0x18] sm:$0xff]
    %v253 = vld [vmem:[%s5 + $0x20] sm:$0xff]
    %v254 = vld [vmem:[%s5 + $0x28] sm:$0xff]
    %v255 = vld [vmem:[%s5 + $0x30] sm:$0xff]
    %v256 = vld [vmem:[%s5 + $0x38] sm:$0xff]
    %v257 = vld [vmem:[%s5 + $0x40] sm:$0xff]
    %v258 = vld [vmem:[%s5 + $0x48] sm:$0xff]
    %v259 = vld [vmem:[%s5 + $0x50] sm:$0xff]
    %v260 = vld [vmem:[%s5 + $0x58] sm:$0xff]
    %v261 = vld [vmem:[%s5 + $0x60] sm:$0xff]
    %v262 = vld [vmem:[%s5 + $0x68] sm:$0xff]
    %v263 = vld [vmem:[%s5 + $0x70] sm:$0xff]
    %v264 = vld [vmem:[%s5 + $0x78] sm:$0xff]
    %v265 = vld [vmem:[%s6] sm:$0x1]
    %266 = vmatprep.subr.mxu0 0.0
    %267 = vmatpush1.msra.mxu0 %v249
    %268 = vmatprep.subr.mxu0 0.0
    %269 = vmatpush1.msra.mxu0 %v250
    %270 = vmatprep.subr.mxu0 0.0
    %271 = vmatpush1.msra.mxu0 %v251
    %272 = vmatprep.subr.mxu0 0.0
    %273 = vmatpush1.msra.mxu0 %v252
    %274 = vmatprep.subr.mxu0 0.0
    %275 = vmatpush1.msra.mxu0 %v253
    %276 = vmatprep.subr.mxu0 0.0
    %277 = vmatpush1.msra.mxu0 %v254
    %278 = vmatprep.subr.mxu0 0.0
    %279 = vmatpush1.msra.mxu0 %v255
    %280 = vmatprep.subr.mxu0 0.0
    %281 = vmatpush1.msra.mxu0 %v256
    %282 = vmatprep.subr.mxu0 0.0
    %283 = vmatpush1.msra.mxu0 %v257
    %284 = vmatprep.subr.mxu0 0.0
    %285 = vmatpush1.msra.mxu0 %v258
    %286 = vmatprep.subr.mxu0 0.0
    %287 = vmatpush1.msra.mxu0 %v259
    %288 = vmatprep.subr.mxu0 0.0
    %289 = vmatpush1.msra.mxu0 %v260
    %290 = vmatprep.subr.mxu0 0.0
    %291 = vmatpush1.msra.mxu0 %v261
    %292 = vmatprep.subr.mxu0 0.0
    %293 = vmatpush1.msra.mxu0 %v262
    %294 = vmatprep.subr.mxu0 0.0
    %295 = vmatpush1.msra.mxu0 %v263
    %296 = vmatprep.subr.mxu0 0.0
    %297 = vmatpush1.msra.mxu0 %v264
    %298 = vmatprep.subr.mxu0 0.0
    %299 = vmatpush1.msra.mxu0 0.0
    %300 = vmatprep.subr.mxu0 0.0
    %301 = vmatpush1.msra.mxu0 0.0
    %302 = vmatprep.subr.mxu0 0.0
    %303 = vmatpush1.msra.mxu0 0.0
    %304 = vmatprep.subr.mxu0 0.0
    %305 = vmatpush1.msra.mxu0 0.0
    %306 = vmatprep.subr.mxu0 0.0
    %307 = vmatpush1.msra.mxu0 0.0
    %308 = vmatprep.subr.mxu0 0.0
    %309 = vmatpush1.msra.mxu0 0.0
    %310 = vmatprep.subr.mxu0 0.0
    %311 = vmatpush1.msra.mxu0 0.0
    %312 = vmatprep.subr.mxu0 0.0
    %313 = vmatpush1.msra.mxu0 0.0
    %314 = vmatprep.subr.mxu0 0.0
    %315 = vmatpush1.msra.mxu0 0.0
    %316 = vmatprep.subr.mxu0 0.0
    %317 = vmatpush1.msra.mxu0 0.0
    %318 = vmatprep.subr.mxu0 0.0
    %319 = vmatpush1.msra.mxu0 0.0
    %320 = vmatprep.subr.mxu0 0.0
    %321 = vmatpush1.msra.mxu0 0.0
    %322 = vmatprep.subr.mxu0 0.0
    %323 = vmatpush1.msra.mxu0 0.0
    %324 = vmatprep.subr.mxu0 0.0
    %325 = vmatpush1.msra.mxu0 0.0
    %326 = vmatprep.subr.mxu0 0.0
    %327 = vmatpush1.msra.mxu0 0.0
    %328 = vmatprep.subr.mxu0 0.0
    %329 = vmatpush1.msra.mxu0 0.0
    %330 = vmatprep.mubr.f32.mxu0 0.0
    %331 = vmatmul.mubr.f32.gmra.mrb[0].mxu0 %v247
    %v332 = vpop.f32.mrb[0].mxu0
    %v333 = vadd.f32 0.0, %v332
    %v334 = vpop.f32.mrb[0].mxu0
    %335 = vmatprep.mubr.f32.mxu0 0.0
    %336 = vmatmul.mubr.f32.gmra.mrb[0].mxu0 %v248
    %v337 = vpop.f32.mrb[0].mxu0
    %v338 = vadd.f32 0.0, %v337
    %v339 = vpop.f32.mrb[0].mxu0
    %340 = vdwg.mxu0
    %v342 = vlaneseq
    %v343 = vshrl.u32 %v342, 7
    %v344 = vsub.s32 0, %v343
    %v345 = vrot.slane %v265, %v344
    %347 = vmatprep.subr.mxu0 0.0
    %348 = vmatpush1.msra.mxu0 %v333
    %349 = vmatprep.subr.mxu0 0.0
    %350 = vmatpush1.msra.mxu0 %v338
    %351 = vmatprep.subr.mxu0 0.0
    %352 = vmatpush1.msra.mxu0 0.0
    %353 = vmatprep.subr.mxu0 0.0
    %354 = vmatpush1.msra.mxu0 0.0
    %355 = vmatprep.subr.mxu0 0.0
    %356 = vmatpush1.msra.mxu0 0.0
    %357 = vmatprep.subr.mxu0 0.0
    %358 = vmatpush1.msra.mxu0 0.0
    %359 = vmatprep.subr.mxu0 0.0
    %360 = vmatpush1.msra.mxu0 0.0
    %361 = vmatprep.subr.mxu0 0.0
    %362 = vmatpush1.msra.mxu0 0.0
    %363 = vmatprep.subr.mxu0 0.0
    %364 = vmatpush1.msra.mxu0 0.0
    %365 = vmatprep.subr.mxu0 0.0
    %366 = vmatpush1.msra.mxu0 0.0
    %367 = vmatprep.subr.mxu0 0.0
    %368 = vmatpush1.msra.mxu0 0.0
    %369 = vmatprep.subr.mxu0 0.0
    %370 = vmatpush1.msra.mxu0 0.0
    %371 = vmatprep.subr.mxu0 0.0
    %372 = vmatpush1.msra.mxu0 0.0
    %373 = vmatprep.subr.mxu0 0.0
    %374 = vmatpush1.msra.mxu0 0.0
    %375 = vmatprep.subr.mxu0 0.0
    %376 = vmatpush1.msra.mxu0 0.0
    %377 = vmatprep.subr.mxu0 0.0
    %378 = vmatpush1.msra.mxu0 0.0
    %379 = vmatprep.subr.mxu0 0.0
    %380 = vmatpush1.msra.mxu0 0.0
    %381 = vmatprep.subr.mxu0 0.0
    %382 = vmatpush1.msra.mxu0 0.0
    %383 = vmatprep.subr.mxu0 0.0
    %384 = vmatpush1.msra.mxu0 0.0
    %385 = vmatprep.subr.mxu0 0.0
    %386 = vmatpush1.msra.mxu0 0.0
    %387 = vmatprep.subr.mxu0 0.0
    %388 = vmatpush1.msra.mxu0 0.0
    %389 = vmatprep.subr.mxu0 0.0
    %390 = vmatpush1.msra.mxu0 0.0
    %391 = vmatprep.subr.mxu0 0.0
    %392 = vmatpush1.msra.mxu0 0.0
    %393 = vmatprep.subr.mxu0 0.0
    %394 = vmatpush1.msra.mxu0 0.0
    %395 = vmatprep.subr.mxu0 0.0
    %396 = vmatpush1.msra.mxu0 0.0
    %397 = vmatprep.subr.mxu0 0.0
    %398 = vmatpush1.msra.mxu0 0.0
    %399 = vmatprep.subr.mxu0 0.0
    %400 = vmatpush1.msra.mxu0 0.0
    %401 = vmatprep.subr.mxu0 0.0
    %402 = vmatpush1.msra.mxu0 0.0
    %403 = vmatprep.subr.mxu0 0.0
    %404 = vmatpush1.msra.mxu0 0.0
    %405 = vmatprep.subr.mxu0 0.0
    %406 = vmatpush1.msra.mxu0 0.0
    %407 = vmatprep.subr.mxu0 0.0
    %408 = vmatpush1.msra.mxu0 0.0
    %409 = vmatprep.subr.mxu0 0.0
    %410 = vmatpush1.msra.mxu0 0.0
    %411 = vmatprep.mubr.f32.mxu0 0.0
    %412 = vmatmul.mubr.f32.gmra.mrb[0].mxu0 %v167
    %v413 = vpop.f32.mrb[0].mxu0
    %v414 = vadd.f32 %v345, %v413
    %v415 = vpop.f32.mrb[0].mxu0
    %416 = vmatprep.mubr.f32.mxu0 0.0
    %417 = vmatmul.mubr.f32.gmra.mrb[0].mxu0 %v170
    %v418 = vpop.f32.mrb[0].mxu0
    %v419 = vadd.f32 %v345, %v418
    %v420 = vpop.f32.mrb[0].mxu0
    %421 = vdwg.mxu0
    %v422 = vmax.f32 %v414, 0.0
    %v423 = vmax.f32 %v419, 0.0
    %v424 = vld [vmem:[%s7] sm:$0xff]
    %v425 = vld [vmem:[%s7 + $0x8] sm:$0xff]
    %v426 = vld [vmem:[%s7 + $0x10] sm:$0xff]
    %v427 = vld [vmem:[%s7 + $0x18] sm:$0xff]
    %v428 = vld [vmem:[%s7 + $0x20] sm:$0xff]
    %v429 = vld [vmem:[%s7 + $0x28] sm:$0xff]
    %v430 = vld [vmem:[%s7 + $0x30] sm:$0xff]
    %v431 = vld [vmem:[%s7 + $0x38] sm:$0xff]
    %v432 = vld [vmem:[%s7 + $0x40] sm:$0xff]
    %v433 = vld [vmem:[%s7 + $0x48] sm:$0xff]
    %v434 = vld [vmem:[%s7 + $0x50] sm:$0xff]
    %v435 = vld [vmem:[%s7 + $0x58] sm:$0xff]
    %v436 = vld [vmem:[%s7 + $0x60] sm:$0xff]
    %v437 = vld [vmem:[%s7 + $0x68] sm:$0xff]
    %v438 = vld [vmem:[%s7 + $0x70] sm:$0xff]
    %v439 = vld [vmem:[%s7 + $0x78] sm:$0xff]
    %v440 = vld [vmem:[%s8] sm:$0x1]
    %441 = vmatprep.subr.mxu0 0.0
    %442 = vmatpush1.msra.mxu0 %v424
    %443 = vmatprep.subr.mxu0 0.0
    %444 = vmatpush1.msra.mxu0 %v425
    %445 = vmatprep.subr.mxu0 0.0
    %446 = vmatpush1.msra.mxu0 %v426
    %447 = vmatprep.subr.mxu0 0.0
    %448 = vmatpush1.msra.mxu0 %v427
    %449 = vmatprep.subr.mxu0 0.0
    %450 = vmatpush1.msra.mxu0 %v428
    %451 = vmatprep.subr.mxu0 0.0
    %452 = vmatpush1.msra.mxu0 %v429
    %453 = vmatprep.subr.mxu0 0.0
    %454 = vmatpush1.msra.mxu0 %v430
    %455 = vmatprep.subr.mxu0 0.0
    %456 = vmatpush1.msra.mxu0 %v431
    %457 = vmatprep.subr.mxu0 0.0
    %458 = vmatpush1.msra.mxu0 %v432
    %459 = vmatprep.subr.mxu0 0.0
    %460 = vmatpush1.msra.mxu0 %v433
    %461 = vmatprep.subr.mxu0 0.0
    %462 = vmatpush1.msra.mxu0 %v434
    %463 = vmatprep.subr.mxu0 0.0
    %464 = vmatpush1.msra.mxu0 %v435
    %465 = vmatprep.subr.mxu0 0.0
    %466 = vmatpush1.msra.mxu0 %v436
    %467 = vmatprep.subr.mxu0 0.0
    %468 = vmatpush1.msra.mxu0 %v437
    %469 = vmatprep.subr.mxu0 0.0
    %470 = vmatpush1.msra.mxu0 %v438
    %471 = vmatprep.subr.mxu0 0.0
    %472 = vmatpush1.msra.mxu0 %v439
    %473 = vmatprep.subr.mxu0 0.0
    %474 = vmatpush1.msra.mxu0 0.0
    %475 = vmatprep.subr.mxu0 0.0
    %476 = vmatpush1.msra.mxu0 0.0
    %477 = vmatprep.subr.mxu0 0.0
    %478 = vmatpush1.msra.mxu0 0.0
    %479 = vmatprep.subr.mxu0 0.0
    %480 = vmatpush1.msra.mxu0 0.0
    %481 = vmatprep.subr.mxu0 0.0
    %482 = vmatpush1.msra.mxu0 0.0
    %483 = vmatprep.subr.mxu0 0.0
    %484 = vmatpush1.msra.mxu0 0.0
    %485 = vmatprep.subr.mxu0 0.0
    %486 = vmatpush1.msra.mxu0 0.0
    %487 = vmatprep.subr.mxu0 0.0
    %488 = vmatpush1.msra.mxu0 0.0
    %489 = vmatprep.subr.mxu0 0.0
    %490 = vmatpush1.msra.mxu0 0.0
    %491 = vmatprep.subr.mxu0 0.0
    %492 = vmatpush1.msra.mxu0 0.0
    %493 = vmatprep.subr.mxu0 0.0
    %494 = vmatpush1.msra.mxu0 0.0
    %495 = vmatprep.subr.mxu0 0.0
    %496 = vmatpush1.msra.mxu0 0.0
    %497 = vmatprep.subr.mxu0 0.0
    %498 = vmatpush1.msra.mxu0 0.0
    %499 = vmatprep.subr.mxu0 0.0
    %500 = vmatpush1.msra.mxu0 0.0
    %501 = vmatprep.subr.mxu0 0.0
    %502 = vmatpush1.msra.mxu0 0.0
    %503 = vmatprep.subr.mxu0 0.0
    %504 = vmatpush1.msra.mxu0 0.0
    %505 = vmatprep.mubr.f32.mxu0 0.0
    %506 = vmatmul.mubr.f32.gmra.mrb[0].mxu0 %v422
    %v507 = vpop.f32.mrb[0].mxu0
    %v508 = vadd.f32 0.0, %v507
    %v509 = vpop.f32.mrb[0].mxu0
    %510 = vmatprep.mubr.f32.mxu0 0.0
    %511 = vmatmul.mubr.f32.gmra.mrb[0].mxu0 %v423
    %v512 = vpop.f32.mrb[0].mxu0
    %v513 = vadd.f32 0.0, %v512
    %v514 = vpop.f32.mrb[0].mxu0
    %515 = vdwg.mxu0
    %v517 = vlaneseq
    %v518 = vshrl.u32 %v517, 7
    %v519 = vsub.s32 0, %v518
    %v520 = vrot.slane %v440, %v519
    %522 = vmatprep.subr.mxu0 0.0
    %523 = vmatpush1.msra.mxu0 %v508
    %524 = vmatprep.subr.mxu0 0.0
    %525 = vmatpush1.msra.mxu0 %v513
    %526 = vmatprep.subr.mxu0 0.0
    %527 = vmatpush1.msra.mxu0 0.0
    %528 = vmatprep.subr.mxu0 0.0
    %529 = vmatpush1.msra.mxu0 0.0
    %530 = vmatprep.subr.mxu0 0.0
    %531 = vmatpush1.msra.mxu0 0.0
    %532 = vmatprep.subr.mxu0 0.0
    %533 = vmatpush1.msra.mxu0 0.0
    %534 = vmatprep.subr.mxu0 0.0
    %535 = vmatpush1.msra.mxu0 0.0
    %536 = vmatprep.subr.mxu0 0.0
    %537 = vmatpush1.msra.mxu0 0.0
    %538 = vmatprep.subr.mxu0 0.0
    %539 = vmatpush1.msra.mxu0 0.0
    %540 = vmatprep.subr.mxu0 0.0
    %541 = vmatpush1.msra.mxu0 0.0
    %542 = vmatprep.subr.mxu0 0.0
    %543 = vmatpush1.msra.mxu0 0.0
    %544 = vmatprep.subr.mxu0 0.0
    %545 = vmatpush1.msra.mxu0 0.0
    %546 = vmatprep.subr.mxu0 0.0
    %547 = vmatpush1.msra.mxu0 0.0
    %548 = vmatprep.subr.mxu0 0.0
    %549 = vmatpush1.msra.mxu0 0.0
    %550 = vmatprep.subr.mxu0 0.0
    %551 = vmatpush1.msra.mxu0 0.0
    %552 = vmatprep.subr.mxu0 0.0
    %553 = vmatpush1.msra.mxu0 0.0
    %554 = vmatprep.subr.mxu0 0.0
    %555 = vmatpush1.msra.mxu0 0.0
    %556 = vmatprep.subr.mxu0 0.0
    %557 = vmatpush1.msra.mxu0 0.0
    %558 = vmatprep.subr.mxu0 0.0
    %559 = vmatpush1.msra.mxu0 0.0
    %560 = vmatprep.subr.mxu0 0.0
    %561 = vmatpush1.msra.mxu0 0.0
    %562 = vmatprep.subr.mxu0 0.0
    %563 = vmatpush1.msra.mxu0 0.0
    %564 = vmatprep.subr.mxu0 0.0
    %565 = vmatpush1.msra.mxu0 0.0
    %566 = vmatprep.subr.mxu0 0.0
    %567 = vmatpush1.msra.mxu0 0.0
    %568 = vmatprep.subr.mxu0 0.0
    %569 = vmatpush1.msra.mxu0 0.0
    %570 = vmatprep.subr.mxu0 0.0
    %571 = vmatpush1.msra.mxu0 0.0
    %572 = vmatprep.subr.mxu0 0.0
    %573 = vmatpush1.msra.mxu0 0.0
    %574 = vmatprep.subr.mxu0 0.0
    %575 = vmatpush1.msra.mxu0 0.0
    %576 = vmatprep.subr.mxu0 0.0
    %577 = vmatpush1.msra.mxu0 0.0
    %578 = vmatprep.subr.mxu0 0.0
    %579 = vmatpush1.msra.mxu0 0.0
    %580 = vmatprep.subr.mxu0 0.0
    %581 = vmatpush1.msra.mxu0 0.0
    %582 = vmatprep.subr.mxu0 0.0
    %583 = vmatpush1.msra.mxu0 0.0
    %584 = vmatprep.subr.mxu0 0.0
    %585 = vmatpush1.msra.mxu0 0.0
    %586 = vmatprep.mubr.f32.mxu0 0.0
    %587 = vmatmul.mubr.f32.gmra.mrb[0].mxu0 %v167
    %v588 = vpop.f32.mrb[0].mxu0
    %v589 = vadd.f32 %v520, %v588
    %v590 = vpop.f32.mrb[0].mxu0
    %591 = vmatprep.mubr.f32.mxu0 0.0
    %592 = vmatmul.mubr.f32.gmra.mrb[0].mxu0 %v170
    %v593 = vpop.f32.mrb[0].mxu0
    %v594 = vadd.f32 %v520, %v593
    %v595 = vpop.f32.mrb[0].mxu0
    %596 = vdwg.mxu0
    %v597 = vmax.f32 %v589, 0.0
    %v598 = vmax.f32 %v594, 0.0
    %v599 = vld [vmem:[%s9] sm:$0xff]
    %v600 = vld [vmem:[%s9 + $0x8] sm:$0xff]
    %v601 = vld [vmem:[%s9 + $0x10] sm:$0xff]
    %v602 = vld [vmem:[%s9 + $0x18] sm:$0xff]
    %v603 = vld [vmem:[%s9 + $0x20] sm:$0xff]
    %v604 = vld [vmem:[%s9 + $0x28] sm:$0xff]
    %v605 = vld [vmem:[%s9 + $0x30] sm:$0xff]
    %v606 = vld [vmem:[%s9 + $0x38] sm:$0xff]
    %v607 = vld [vmem:[%s9 + $0x40] sm:$0xff]
    %v608 = vld [vmem:[%s9 + $0x48] sm:$0xff]
    %v609 = vld [vmem:[%s9 + $0x50] sm:$0xff]
    %v610 = vld [vmem:[%s9 + $0x58] sm:$0xff]
    %v611 = vld [vmem:[%s9 + $0x60] sm:$0xff]
    %v612 = vld [vmem:[%s9 + $0x68] sm:$0xff]
    %v613 = vld [vmem:[%s9 + $0x70] sm:$0xff]
    %v614 = vld [vmem:[%s9 + $0x78] sm:$0xff]
    %v615 = vld [vmem:[%s10] sm:$0x1]
    %616 = vmatprep.subr.mxu0 0.0
    %617 = vmatpush1.msra.mxu0 %v599
    %618 = vmatprep.subr.mxu0 0.0
    %619 = vmatpush1.msra.mxu0 %v600
    %620 = vmatprep.subr.mxu0 0.0
    %621 = vmatpush1.msra.mxu0 %v601
    %622 = vmatprep.subr.mxu0 0.0
    %623 = vmatpush1.msra.mxu0 %v602
    %624 = vmatprep.subr.mxu0 0.0
    %625 = vmatpush1.msra.mxu0 %v603
    %626 = vmatprep.subr.mxu0 0.0
    %627 = vmatpush1.msra.mxu0 %v604
    %628 = vmatprep.subr.mxu0 0.0
    %629 = vmatpush1.msra.mxu0 %v605
    %630 = vmatprep.subr.mxu0 0.0
    %631 = vmatpush1.msra.mxu0 %v606
    %632 = vmatprep.subr.mxu0 0.0
    %633 = vmatpush1.msra.mxu0 %v607
    %634 = vmatprep.subr.mxu0 0.0
    %635 = vmatpush1.msra.mxu0 %v608
    %636 = vmatprep.subr.mxu0 0.0
    %637 = vmatpush1.msra.mxu0 %v609
    %638 = vmatprep.subr.mxu0 0.0
    %639 = vmatpush1.msra.mxu0 %v610
    %640 = vmatprep.subr.mxu0 0.0
    %641 = vmatpush1.msra.mxu0 %v611
    %642 = vmatprep.subr.mxu0 0.0
    %643 = vmatpush1.msra.mxu0 %v612
    %644 = vmatprep.subr.mxu0 0.0
    %645 = vmatpush1.msra.mxu0 %v613
    %646 = vmatprep.subr.mxu0 0.0
    %647 = vmatpush1.msra.mxu0 %v614
    %648 = vmatprep.subr.mxu0 0.0
    %649 = vmatpush1.msra.mxu0 0.0
    %650 = vmatprep.subr.mxu0 0.0
    %651 = vmatpush1.msra.mxu0 0.0
    %652 = vmatprep.subr.mxu0 0.0
    %653 = vmatpush1.msra.mxu0 0.0
    %654 = vmatprep.subr.mxu0 0.0
    %655 = vmatpush1.msra.mxu0 0.0
    %656 = vmatprep.subr.mxu0 0.0
    %657 = vmatpush1.msra.mxu0 0.0
    %658 = vmatprep.subr.mxu0 0.0
    %659 = vmatpush1.msra.mxu0 0.0
    %660 = vmatprep.subr.mxu0 0.0
    %661 = vmatpush1.msra.mxu0 0.0
    %662 = vmatprep.subr.mxu0 0.0
    %663 = vmatpush1.msra.mxu0 0.0
    %664 = vmatprep.subr.mxu0 0.0
    %665 = vmatpush1.msra.mxu0 0.0
    %666 = vmatprep.subr.mxu0 0.0
    %667 = vmatpush1.msra.mxu0 0.0
    %668 = vmatprep.subr.mxu0 0.0
    %669 = vmatpush1.msra.mxu0 0.0
    %670 = vmatprep.subr.mxu0 0.0
    %671 = vmatpush1.msra.mxu0 0.0
    %672 = vmatprep.subr.mxu0 0.0
    %673 = vmatpush1.msra.mxu0 0.0
    %674 = vmatprep.subr.mxu0 0.0
    %675 = vmatpush1.msra.mxu0 0.0
    %676 = vmatprep.subr.mxu0 0.0
    %677 = vmatpush1.msra.mxu0 0.0
    %678 = vmatprep.subr.mxu0 0.0
    %679 = vmatpush1.msra.mxu0 0.0
    %680 = vmatprep.mubr.f32.mxu0 0.0
    %681 = vmatmul.mubr.f32.gmra.mrb[0].mxu0 %v597
    %v682 = vpop.f32.mrb[0].mxu0
    %v683 = vadd.f32 0.0, %v682
    %v684 = vpop.f32.mrb[0].mxu0
    %685 = vmatprep.mubr.f32.mxu0 0.0
    %686 = vmatmul.mubr.f32.gmra.mrb[0].mxu0 %v598
    %v687 = vpop.f32.mrb[0].mxu0
    %v688 = vadd.f32 0.0, %v687
    %v689 = vpop.f32.mrb[0].mxu0
    %690 = vdwg.mxu0
    %v692 = vlaneseq
    %v693 = vshrl.u32 %v692, 7
    %v694 = vsub.s32 0, %v693
    %v695 = vrot.slane %v615, %v694
    %697 = vmatprep.subr.mxu0 0.0
    %698 = vmatpush1.msra.mxu0 %v683
    %699 = vmatprep.subr.mxu0 0.0
    %700 = vmatpush1.msra.mxu0 %v688
    %701 = vmatprep.subr.mxu0 0.0
    %702 = vmatpush1.msra.mxu0 0.0
    %703 = vmatprep.subr.mxu0 0.0
    %704 = vmatpush1.msra.mxu0 0.0
    %705 = vmatprep.subr.mxu0 0.0
    %706 = vmatpush1.msra.mxu0 0.0
    %707 = vmatprep.subr.mxu0 0.0
    %708 = vmatpush1.msra.mxu0 0.0
    %709 = vmatprep.subr.mxu0 0.0
    %710 = vmatpush1.msra.mxu0 0.0
    %711 = vmatprep.subr.mxu0 0.0
    %712 = vmatpush1.msra.mxu0 0.0
    %713 = vmatprep.subr.mxu0 0.0
    %714 = vmatpush1.msra.mxu0 0.0
    %715 = vmatprep.subr.mxu0 0.0
    %716 = vmatpush1.msra.mxu0 0.0
    %717 = vmatprep.subr.mxu0 0.0
    %718 = vmatpush1.msra.mxu0 0.0
    %719 = vmatprep.subr.mxu0 0.0
    %720 = vmatpush1.msra.mxu0 0.0
    %721 = vmatprep.subr.mxu0 0.0
    %722 = vmatpush1.msra.mxu0 0.0
    %723 = vmatprep.subr.mxu0 0.0
    %724 = vmatpush1.msra.mxu0 0.0
    %725 = vmatprep.subr.mxu0 0.0
    %726 = vmatpush1.msra.mxu0 0.0
    %727 = vmatprep.subr.mxu0 0.0
    %728 = vmatpush1.msra.mxu0 0.0
    %729 = vmatprep.subr.mxu0 0.0
    %730 = vmatpush1.msra.mxu0 0.0
    %731 = vmatprep.subr.mxu0 0.0
    %732 = vmatpush1.msra.mxu0 0.0
    %733 = vmatprep.subr.mxu0 0.0
    %734 = vmatpush1.msra.mxu0 0.0
    %735 = vmatprep.subr.mxu0 0.0
    %736 = vmatpush1.msra.mxu0 0.0
    %737 = vmatprep.subr.mxu0 0.0
    %738 = vmatpush1.msra.mxu0 0.0
    %739 = vmatprep.subr.mxu0 0.0
    %740 = vmatpush1.msra.mxu0 0.0
    %741 = vmatprep.subr.mxu0 0.0
    %742 = vmatpush1.msra.mxu0 0.0
    %743 = vmatprep.subr.mxu0 0.0
    %744 = vmatpush1.msra.mxu0 0.0
    %745 = vmatprep.subr.mxu0 0.0
    %746 = vmatpush1.msra.mxu0 0.0
    %747 = vmatprep.subr.mxu0 0.0
    %748 = vmatpush1.msra.mxu0 0.0
    %749 = vmatprep.subr.mxu0 0.0
    %750 = vmatpush1.msra.mxu0 0.0
    %751 = vmatprep.subr.mxu0 0.0
    %752 = vmatpush1.msra.mxu0 0.0
    %753 = vmatprep.subr.mxu0 0.0
    %754 = vmatpush1.msra.mxu0 0.0
    %755 = vmatprep.subr.mxu0 0.0
    %756 = vmatpush1.msra.mxu0 0.0
    %757 = vmatprep.subr.mxu0 0.0
    %758 = vmatpush1.msra.mxu0 0.0
    %759 = vmatprep.subr.mxu0 0.0
    %760 = vmatpush1.msra.mxu0 0.0
    %761 = vmatprep.mubr.f32.mxu0 0.0
    %762 = vmatmul.mubr.f32.gmra.mrb[0].mxu0 %v167
    %v763 = vpop.f32.mrb[0].mxu0
    %v764 = vadd.f32 %v695, %v763
    %v765 = vpop.f32.mrb[0].mxu0
    %766 = vmatprep.mubr.f32.mxu0 0.0
    %767 = vmatmul.mubr.f32.gmra.mrb[0].mxu0 %v170
    %v768 = vpop.f32.mrb[0].mxu0
    %v769 = vadd.f32 %v695, %v768
    %v770 = vpop.f32.mrb[0].mxu0
    %771 = vdwg.mxu0
    %v772 = vmax.f32 %v764, 0.0
    %v773 = vmax.f32 %v769, 0.0
    %v774 = vld [vmem:[%s11] sm:$0xff]
    %v775 = vld [vmem:[%s11 + $0x8] sm:$0xff]
    %v776 = vld [vmem:[%s11 + $0x10] sm:$0xff]
    %v777 = vld [vmem:[%s11 + $0x18] sm:$0xff]
    %v778 = vld [vmem:[%s11 + $0x20] sm:$0xff]
    %v779 = vld [vmem:[%s11 + $0x28] sm:$0xff]
    %v780 = vld [vmem:[%s11 + $0x30] sm:$0xff]
    %v781 = vld [vmem:[%s11 + $0x38] sm:$0xff]
    %v782 = vld [vmem:[%s11 + $0x40] sm:$0xff]
    %v783 = vld [vmem:[%s11 + $0x48] sm:$0xff]
    %v784 = vld [vmem:[%s11 + $0x50] sm:$0xff]
    %v785 = vld [vmem:[%s11 + $0x58] sm:$0xff]
    %v786 = vld [vmem:[%s11 + $0x60] sm:$0xff]
    %v787 = vld [vmem:[%s11 + $0x68] sm:$0xff]
    %v788 = vld [vmem:[%s11 + $0x70] sm:$0xff]
    %v789 = vld [vmem:[%s11 + $0x78] sm:$0xff]
    %v790 = vld [vmem:[%s12] sm:$0x1]
    %791 = vmatprep.subr.mxu0 0.0
    %792 = vmatpush1.msra.mxu0 %v774
    %793 = vmatprep.subr.mxu0 0.0
    %794 = vmatpush1.msra.mxu0 %v775
    %795 = vmatprep.subr.mxu0 0.0
    %796 = vmatpush1.msra.mxu0 %v776
    %797 = vmatprep.subr.mxu0 0.0
    %798 = vmatpush1.msra.mxu0 %v777
    %799 = vmatprep.subr.mxu0 0.0
    %800 = vmatpush1.msra.mxu0 %v778
    %801 = vmatprep.subr.mxu0 0.0
    %802 = vmatpush1.msra.mxu0 %v779
    %803 = vmatprep.subr.mxu0 0.0
    %804 = vmatpush1.msra.mxu0 %v780
    %805 = vmatprep.subr.mxu0 0.0
    %806 = vmatpush1.msra.mxu0 %v781
    %807 = vmatprep.subr.mxu0 0.0
    %808 = vmatpush1.msra.mxu0 %v782
    %809 = vmatprep.subr.mxu0 0.0
    %810 = vmatpush1.msra.mxu0 %v783
    %811 = vmatprep.subr.mxu0 0.0
    %812 = vmatpush1.msra.mxu0 %v784
    %813 = vmatprep.subr.mxu0 0.0
    %814 = vmatpush1.msra.mxu0 %v785
    %815 = vmatprep.subr.mxu0 0.0
    %816 = vmatpush1.msra.mxu0 %v786
    %817 = vmatprep.subr.mxu0 0.0
    %818 = vmatpush1.msra.mxu0 %v787
    %819 = vmatprep.subr.mxu0 0.0
    %820 = vmatpush1.msra.mxu0 %v788
    %821 = vmatprep.subr.mxu0 0.0
    %822 = vmatpush1.msra.mxu0 %v789
    %823 = vmatprep.subr.mxu0 0.0
    %824 = vmatpush1.msra.mxu0 0.0
    %825 = vmatprep.subr.mxu0 0.0
    %826 = vmatpush1.msra.mxu0 0.0
    %827 = vmatprep.subr.mxu0 0.0
    %828 = vmatpush1.msra.mxu0 0.0
    %829 = vmatprep.subr.mxu0 0.0
    %830 = vmatpush1.msra.mxu0 0.0
    %831 = vmatprep.subr.mxu0 0.0
    %832 = vmatpush1.msra.mxu0 0.0
    %833 = vmatprep.subr.mxu0 0.0
    %834 = vmatpush1.msra.mxu0 0.0
    %835 = vmatprep.subr.mxu0 0.0
    %836 = vmatpush1.msra.mxu0 0.0
    %837 = vmatprep.subr.mxu0 0.0
    %838 = vmatpush1.msra.mxu0 0.0
    %839 = vmatprep.subr.mxu0 0.0
    %840 = vmatpush1.msra.mxu0 0.0
    %841 = vmatprep.subr.mxu0 0.0
    %842 = vmatpush1.msra.mxu0 0.0
    %843 = vmatprep.subr.mxu0 0.0
    %844 = vmatpush1.msra.mxu0 0.0
    %845 = vmatprep.subr.mxu0 0.0
    %846 = vmatpush1.msra.mxu0 0.0
    %847 = vmatprep.subr.mxu0 0.0
    %848 = vmatpush1.msra.mxu0 0.0
    %849 = vmatprep.subr.mxu0 0.0
    %850 = vmatpush1.msra.mxu0 0.0
    %851 = vmatprep.subr.mxu0 0.0
    %852 = vmatpush1.msra.mxu0 0.0
    %853 = vmatprep.subr.mxu0 0.0
    %854 = vmatpush1.msra.mxu0 0.0
    %855 = vmatprep.mubr.f32.mxu0 0.0
    %856 = vmatmul.mubr.f32.gmra.mrb[0].mxu0 %v772
    %v857 = vpop.f32.mrb[0].mxu0
    %v858 = vadd.f32 0.0, %v857
    %v859 = vpop.f32.mrb[0].mxu0
    %860 = vmatprep.mubr.f32.mxu0 0.0
    %861 = vmatmul.mubr.f32.gmra.mrb[0].mxu0 %v773
    %v862 = vpop.f32.mrb[0].mxu0
    %v863 = vadd.f32 0.0, %v862
    %v864 = vpop.f32.mrb[0].mxu0
    %865 = vdwg.mxu0
    %v867 = vlaneseq
    %v868 = vshrl.u32 %v867, 7
    %v869 = vsub.s32 0, %v868
    %v870 = vrot.slane %v790, %v869
    %872 = vmatprep.subr.mxu0 0.0
    %873 = vmatpush1.msra.mxu0 %v858
    %874 = vmatprep.subr.mxu0 0.0
    %875 = vmatpush1.msra.mxu0 %v863
    %876 = vmatprep.subr.mxu0 0.0
    %877 = vmatpush1.msra.mxu0 0.0
    %878 = vmatprep.subr.mxu0 0.0
    %879 = vmatpush1.msra.mxu0 0.0
    %880 = vmatprep.subr.mxu0 0.0
    %881 = vmatpush1.msra.mxu0 0.0
    %882 = vmatprep.subr.mxu0 0.0
    %883 = vmatpush1.msra.mxu0 0.0
    %884 = vmatprep.subr.mxu0 0.0
    %885 = vmatpush1.msra.mxu0 0.0
    %886 = vmatprep.subr.mxu0 0.0
    %887 = vmatpush1.msra.mxu0 0.0
    %888 = vmatprep.subr.mxu0 0.0
    %889 = vmatpush1.msra.mxu0 0.0
    %890 = vmatprep.subr.mxu0 0.0
    %891 = vmatpush1.msra.mxu0 0.0
    %892 = vmatprep.subr.mxu0 0.0
    %893 = vmatpush1.msra.mxu0 0.0
    %894 = vmatprep.subr.mxu0 0.0
    %895 = vmatpush1.msra.mxu0 0.0
    %896 = vmatprep.subr.mxu0 0.0
    %897 = vmatpush1.msra.mxu0 0.0
    %898 = vmatprep.subr.mxu0 0.0
    %899 = vmatpush1.msra.mxu0 0.0
    %900 = vmatprep.subr.mxu0 0.0
    %901 = vmatpush1.msra.mxu0 0.0
    %902 = vmatprep.subr.mxu0 0.0
    %903 = vmatpush1.msra.mxu0 0.0
    %904 = vmatprep.subr.mxu0 0.0
    %905 = vmatpush1.msra.mxu0 0.0
    %906 = vmatprep.subr.mxu0 0.0
    %907 = vmatpush1.msra.mxu0 0.0
    %908 = vmatprep.subr.mxu0 0.0
    %909 = vmatpush1.msra.mxu0 0.0
    %910 = vmatprep.subr.mxu0 0.0
    %911 = vmatpush1.msra.mxu0 0.0
    %912 = vmatprep.subr.mxu0 0.0
    %913 = vmatpush1.msra.mxu0 0.0
    %914 = vmatprep.subr.mxu0 0.0
    %915 = vmatpush1.msra.mxu0 0.0
    %916 = vmatprep.subr.mxu0 0.0
    %917 = vmatpush1.msra.mxu0 0.0
    %918 = vmatprep.subr.mxu0 0.0
    %919 = vmatpush1.msra.mxu0 0.0
    %920 = vmatprep.subr.mxu0 0.0
    %921 = vmatpush1.msra.mxu0 0.0
    %922 = vmatprep.subr.mxu0 0.0
    %923 = vmatpush1.msra.mxu0 0.0
    %924 = vmatprep.subr.mxu0 0.0
    %925 = vmatpush1.msra.mxu0 0.0
    %926 = vmatprep.subr.mxu0 0.0
    %927 = vmatpush1.msra.mxu0 0.0
    %928 = vmatprep.subr.mxu0 0.0
    %929 = vmatpush1.msra.mxu0 0.0
    %930 = vmatprep.subr.mxu0 0.0
    %931 = vmatpush1.msra.mxu0 0.0
    %932 = vmatprep.subr.mxu0 0.0
    %933 = vmatpush1.msra.mxu0 0.0
    %934 = vmatprep.subr.mxu0 0.0
    %935 = vmatpush1.msra.mxu0 0.0
    %936 = vmatprep.mubr.f32.mxu0 0.0
    %937 = vmatmul.mubr.f32.gmra.mrb[0].mxu0 %v167
    %v938 = vpop.f32.mrb[0].mxu0
    %v939 = vadd.f32 %v870, %v938
    %v940 = vpop.f32.mrb[0].mxu0
    %941 = vmatprep.mubr.f32.mxu0 0.0
    %942 = vmatmul.mubr.f32.gmra.mrb[0].mxu0 %v170
    %v943 = vpop.f32.mrb[0].mxu0
    %v944 = vadd.f32 %v870, %v943
    %v945 = vpop.f32.mrb[0].mxu0
    %946 = vdwg.mxu0
    %v947 = vmax.f32 %v939, 0.0
    %v948 = vmax.f32 %v944, 0.0
    %v949 = vld [vmem:[%s13] sm:$0xff]
    %v950 = vld [vmem:[%s13 + $0x8] sm:$0xff]
    %v951 = vld [vmem:[%s13 + $0x10] sm:$0xff]
    %v952 = vld [vmem:[%s13 + $0x18] sm:$0xff]
    %v953 = vld [vmem:[%s13 + $0x20] sm:$0xff]
    %v954 = vld [vmem:[%s13 + $0x28] sm:$0xff]
    %v955 = vld [vmem:[%s13 + $0x30] sm:$0xff]
    %v956 = vld [vmem:[%s13 + $0x38] sm:$0xff]
    %v957 = vld [vmem:[%s13 + $0x40] sm:$0xff]
    %v958 = vld [vmem:[%s13 + $0x48] sm:$0xff]
    %v959 = vld [vmem:[%s13 + $0x50] sm:$0xff]
    %v960 = vld [vmem:[%s13 + $0x58] sm:$0xff]
    %v961 = vld [vmem:[%s13 + $0x60] sm:$0xff]
    %v962 = vld [vmem:[%s13 + $0x68] sm:$0xff]
    %v963 = vld [vmem:[%s13 + $0x70] sm:$0xff]
    %v964 = vld [vmem:[%s13 + $0x78] sm:$0xff]
    %v965 = vld [vmem:[%s14] sm:$0x1]
    %966 = vmatprep.subr.mxu0 0.0
    %967 = vmatpush1.msra.mxu0 %v949
    %968 = vmatprep.subr.mxu0 0.0
    %969 = vmatpush1.msra.mxu0 %v950
    %970 = vmatprep.subr.mxu0 0.0
    %971 = vmatpush1.msra.mxu0 %v951
    %972 = vmatprep.subr.mxu0 0.0
    %973 = vmatpush1.msra.mxu0 %v952
    %974 = vmatprep.subr.mxu0 0.0
    %975 = vmatpush1.msra.mxu0 %v953
    %976 = vmatprep.subr.mxu0 0.0
    %977 = vmatpush1.msra.mxu0 %v954
    %978 = vmatprep.subr.mxu0 0.0
    %979 = vmatpush1.msra.mxu0 %v955
    %980 = vmatprep.subr.mxu0 0.0
    %981 = vmatpush1.msra.mxu0 %v956
    %982 = vmatprep.subr.mxu0 0.0
    %983 = vmatpush1.msra.mxu0 %v957
    %984 = vmatprep.subr.mxu0 0.0
    %985 = vmatpush1.msra.mxu0 %v958
    %986 = vmatprep.subr.mxu0 0.0
    %987 = vmatpush1.msra.mxu0 %v959
    %988 = vmatprep.subr.mxu0 0.0
    %989 = vmatpush1.msra.mxu0 %v960
    %990 = vmatprep.subr.mxu0 0.0
    %991 = vmatpush1.msra.mxu0 %v961
    %992 = vmatprep.subr.mxu0 0.0
    %993 = vmatpush1.msra.mxu0 %v962
    %994 = vmatprep.subr.mxu0 0.0
    %995 = vmatpush1.msra.mxu0 %v963
    %996 = vmatprep.subr.mxu0 0.0
    %997 = vmatpush1.msra.mxu0 %v964
    %998 = vmatprep.subr.mxu0 0.0
    %999 = vmatpush1.msra.mxu0 0.0
    %1000 = vmatprep.subr.mxu0 0.0
    %1001 = vmatpush1.msra.mxu0 0.0
    %1002 = vmatprep.subr.mxu0 0.0
    %1003 = vmatpush1.msra.mxu0 0.0
    %1004 = vmatprep.subr.mxu0 0.0
    %1005 = vmatpush1.msra.mxu0 0.0
    %1006 = vmatprep.subr.mxu0 0.0
    %1007 = vmatpush1.msra.mxu0 0.0
    %1008 = vmatprep.subr.mxu0 0.0
    %1009 = vmatpush1.msra.mxu0 0.0
    %1010 = vmatprep.subr.mxu0 0.0
    %1011 = vmatpush1.msra.mxu0 0.0
    %1012 = vmatprep.subr.mxu0 0.0
    %1013 = vmatpush1.msra.mxu0 0.0
    %1014 = vmatprep.subr.mxu0 0.0
    %1015 = vmatpush1.msra.mxu0 0.0
    %1016 = vmatprep.subr.mxu0 0.0
    %1017 = vmatpush1.msra.mxu0 0.0
    %1018 = vmatprep.subr.mxu0 0.0
    %1019 = vmatpush1.msra.mxu0 0.0
    %1020 = vmatprep.subr.mxu0 0.0
    %1021 = vmatpush1.msra.mxu0 0.0
    %1022 = vmatprep.subr.mxu0 0.0
    %1023 = vmatpush1.msra.mxu0 0.0
    %1024 = vmatprep.subr.mxu0 0.0
    %1025 = vmatpush1.msra.mxu0 0.0
    %1026 = vmatprep.subr.mxu0 0.0
    %1027 = vmatpush1.msra.mxu0 0.0
    %1028 = vmatprep.subr.mxu0 0.0
    %1029 = vmatpush1.msra.mxu0 0.0
    %1030 = vmatprep.mubr.f32.mxu0 0.0
    %1031 = vmatmul.mubr.f32.gmra.mrb[0].mxu0 %v947
    %v1032 = vpop.f32.mrb[0].mxu0
    %v1033 = vadd.f32 0.0, %v1032
    %v1034 = vpop.f32.mrb[0].mxu0
    %1035 = vmatprep.mubr.f32.mxu0 0.0
    %1036 = vmatmul.mubr.f32.gmra.mrb[0].mxu0 %v948
    %v1037 = vpop.f32.mrb[0].mxu0
    %v1038 = vadd.f32 0.0, %v1037
    %v1039 = vpop.f32.mrb[0].mxu0
    %1040 = vdwg.mxu0
    %v1042 = vlaneseq
    %v1043 = vshrl.u32 %v1042, 7
    %v1044 = vsub.s32 0, %v1043
    %v1045 = vrot.slane %v965, %v1044
    %1047 = vmatprep.subr.mxu0 0.0
    %1048 = vmatpush1.msra.mxu0 %v1033
    %1049 = vmatprep.subr.mxu0 0.0
    %1050 = vmatpush1.msra.mxu0 %v1038
    %1051 = vmatprep.subr.mxu0 0.0
    %1052 = vmatpush1.msra.mxu0 0.0
    %1053 = vmatprep.subr.mxu0 0.0
    %1054 = vmatpush1.msra.mxu0 0.0
    %1055 = vmatprep.subr.mxu0 0.0
    %1056 = vmatpush1.msra.mxu0 0.0
    %1057 = vmatprep.subr.mxu0 0.0
    %1058 = vmatpush1.msra.mxu0 0.0
    %1059 = vmatprep.subr.mxu0 0.0
    %1060 = vmatpush1.msra.mxu0 0.0
    %1061 = vmatprep.subr.mxu0 0.0
    %1062 = vmatpush1.msra.mxu0 0.0
    %1063 = vmatprep.subr.mxu0 0.0
    %1064 = vmatpush1.msra.mxu0 0.0
    %1065 = vmatprep.subr.mxu0 0.0
    %1066 = vmatpush1.msra.mxu0 0.0
    %1067 = vmatprep.subr.mxu0 0.0
    %1068 = vmatpush1.msra.mxu0 0.0
    %1069 = vmatprep.subr.mxu0 0.0
    %1070 = vmatpush1.msra.mxu0 0.0
    %1071 = vmatprep.subr.mxu0 0.0
    %1072 = vmatpush1.msra.mxu0 0.0
    %1073 = vmatprep.subr.mxu0 0.0
    %1074 = vmatpush1.msra.mxu0 0.0
    %1075 = vmatprep.subr.mxu0 0.0
    %1076 = vmatpush1.msra.mxu0 0.0
    %1077 = vmatprep.subr.mxu0 0.0
    %1078 = vmatpush1.msra.mxu0 0.0
    %1079 = vmatprep.subr.mxu0 0.0
    %1080 = vmatpush1.msra.mxu0 0.0
    %1081 = vmatprep.subr.mxu0 0.0
    %1082 = vmatpush1.msra.mxu0 0.0
    %1083 = vmatprep.subr.mxu0 0.0
    %1084 = vmatpush1.msra.mxu0 0.0
    %1085 = vmatprep.subr.mxu0 0.0
    %1086 = vmatpush1.msra.mxu0 0.0
    %1087 = vmatprep.subr.mxu0 0.0
    %1088 = vmatpush1.msra.mxu0 0.0
    %1089 = vmatprep.subr.mxu0 0.0
    %1090 = vmatpush1.msra.mxu0 0.0
    %1091 = vmatprep.subr.mxu0 0.0
    %1092 = vmatpush1.msra.mxu0 0.0
    %1093 = vmatprep.subr.mxu0 0.0
    %1094 = vmatpush1.msra.mxu0 0.0
    %1095 = vmatprep.subr.mxu0 0.0
    %1096 = vmatpush1.msra.mxu0 0.0
    %1097 = vmatprep.subr.mxu0 0.0
    %1098 = vmatpush1.msra.mxu0 0.0
    %1099 = vmatprep.subr.mxu0 0.0
    %1100 = vmatpush1.msra.mxu0 0.0
    %1101 = vmatprep.subr.mxu0 0.0
    %1102 = vmatpush1.msra.mxu0 0.0
    %1103 = vmatprep.subr.mxu0 0.0
    %1104 = vmatpush1.msra.mxu0 0.0
    %1105 = vmatprep.subr.mxu0 0.0
    %1106 = vmatpush1.msra.mxu0 0.0
    %1107 = vmatprep.subr.mxu0 0.0
    %1108 = vmatpush1.msra.mxu0 0.0
    %1109 = vmatprep.subr.mxu0 0.0
    %1110 = vmatpush1.msra.mxu0 0.0
    %1111 = vmatprep.mubr.f32.mxu0 0.0
    %1112 = vmatmul.mubr.f32.gmra.mrb[0].mxu0 %v167
    %v1113 = vpop.f32.mrb[0].mxu0
    %v1114 = vadd.f32 %v1045, %v1113
    %v1115 = vpop.f32.mrb[0].mxu0
    %1116 = vmatprep.mubr.f32.mxu0 0.0
    %1117 = vmatmul.mubr.f32.gmra.mrb[0].mxu0 %v170
    %v1118 = vpop.f32.mrb[0].mxu0
    %v1119 = vadd.f32 %v1045, %v1118
    %v1120 = vpop.f32.mrb[0].mxu0
    %1121 = vdwg.mxu0
    %v1122 = vmax.f32 %v1114, 0.0
    %v1123 = vmax.f32 %v1119, 0.0
    %v1124 = vld [vmem:[%s2] sm:$0xff]
    %v1125 = vld [vmem:[%s2 + $0x8] sm:$0xff]
    %vm1126 = vcmp.gt.f32.partialorder %v1124, 0.5
    %vm1127 = vcmp.gt.f32.partialorder %v1125, 0.5
    %v1128 = vsel %vm1126, 1, 0
    %v1129 = vsel %vm1127, 1, 0
    %1130 = vset.pattern.permute.xlu0 0
    %1131 = vperm.xlu0 %1130, %v1128
    %v1132 = vpop.permute.xlu0 %1131
    %1133 = vset.pattern.permute.xlu0 0
    %1134 = vperm.xlu0 %1133, %v1129
    %v1135 = vpop.permute.xlu0 %1134
    %vm1136 = vcmp.eq.s32.totalorder %v1132, 1
    %vm1137 = vcmp.eq.s32.totalorder %v1135, 1
    %v1138 = vsel %vm1136, %v1122, -3e+38
    %v1139 = vsel %vm1137, %v1123, -3e+38
    %v1140 = vmax.f32 %v1138, %v1139
    %v1141 = vrot.slane %v1140, 4
    %v1142 = vmax.f32 %v1140, %v1141
    %v1143 = vrot.slane %v1142, 2
    %v1144 = vmax.f32 %v1142, %v1143
    %v1145 = vrot.slane %v1144, 1
    %v1146 = vmax.f32 %v1144, %v1145
    %v1147 = vld [vmem:[%s15] sm:$0xff]
    %v1148 = vld [vmem:[%s15 + $0x8] sm:$0xff]
    %v1149 = vld [vmem:[%s15 + $0x10] sm:$0xff]
    %v1150 = vld [vmem:[%s15 + $0x18] sm:$0xff]
    %v1151 = vld [vmem:[%s15 + $0x20] sm:$0xff]
    %v1152 = vld [vmem:[%s15 + $0x28] sm:$0xff]
    %v1153 = vld [vmem:[%s15 + $0x30] sm:$0xff]
    %v1154 = vld [vmem:[%s15 + $0x38] sm:$0xff]
    %v1155 = vld [vmem:[%s15 + $0x40] sm:$0xff]
    %v1156 = vld [vmem:[%s15 + $0x48] sm:$0xff]
    %v1157 = vld [vmem:[%s15 + $0x50] sm:$0xff]
    %v1158 = vld [vmem:[%s15 + $0x58] sm:$0xff]
    %v1159 = vld [vmem:[%s15 + $0x60] sm:$0xff]
    %v1160 = vld [vmem:[%s15 + $0x68] sm:$0xff]
    %v1161 = vld [vmem:[%s15 + $0x70] sm:$0xff]
    %v1162 = vld [vmem:[%s15 + $0x78] sm:$0xff]
    %v1163 = vld [vmem:[%s16] sm:$0x1]
    %1164 = vmatprep.subr.mxu0 0.0
    %1165 = vmatpush1.msra.mxu0 %v1147
    %1166 = vmatprep.subr.mxu0 0.0
    %1167 = vmatpush1.msra.mxu0 %v1148
    %1168 = vmatprep.subr.mxu0 0.0
    %1169 = vmatpush1.msra.mxu0 %v1149
    %1170 = vmatprep.subr.mxu0 0.0
    %1171 = vmatpush1.msra.mxu0 %v1150
    %1172 = vmatprep.subr.mxu0 0.0
    %1173 = vmatpush1.msra.mxu0 %v1151
    %1174 = vmatprep.subr.mxu0 0.0
    %1175 = vmatpush1.msra.mxu0 %v1152
    %1176 = vmatprep.subr.mxu0 0.0
    %1177 = vmatpush1.msra.mxu0 %v1153
    %1178 = vmatprep.subr.mxu0 0.0
    %1179 = vmatpush1.msra.mxu0 %v1154
    %1180 = vmatprep.subr.mxu0 0.0
    %1181 = vmatpush1.msra.mxu0 %v1155
    %1182 = vmatprep.subr.mxu0 0.0
    %1183 = vmatpush1.msra.mxu0 %v1156
    %1184 = vmatprep.subr.mxu0 0.0
    %1185 = vmatpush1.msra.mxu0 %v1157
    %1186 = vmatprep.subr.mxu0 0.0
    %1187 = vmatpush1.msra.mxu0 %v1158
    %1188 = vmatprep.subr.mxu0 0.0
    %1189 = vmatpush1.msra.mxu0 %v1159
    %1190 = vmatprep.subr.mxu0 0.0
    %1191 = vmatpush1.msra.mxu0 %v1160
    %1192 = vmatprep.subr.mxu0 0.0
    %1193 = vmatpush1.msra.mxu0 %v1161
    %1194 = vmatprep.subr.mxu0 0.0
    %1195 = vmatpush1.msra.mxu0 %v1162
    %1196 = vmatprep.subr.mxu0 0.0
    %1197 = vmatpush1.msra.mxu0 0.0
    %1198 = vmatprep.subr.mxu0 0.0
    %1199 = vmatpush1.msra.mxu0 0.0
    %1200 = vmatprep.subr.mxu0 0.0
    %1201 = vmatpush1.msra.mxu0 0.0
    %1202 = vmatprep.subr.mxu0 0.0
    %1203 = vmatpush1.msra.mxu0 0.0
    %1204 = vmatprep.subr.mxu0 0.0
    %1205 = vmatpush1.msra.mxu0 0.0
    %1206 = vmatprep.subr.mxu0 0.0
    %1207 = vmatpush1.msra.mxu0 0.0
    %1208 = vmatprep.subr.mxu0 0.0
    %1209 = vmatpush1.msra.mxu0 0.0
    %1210 = vmatprep.subr.mxu0 0.0
    %1211 = vmatpush1.msra.mxu0 0.0
    %1212 = vmatprep.subr.mxu0 0.0
    %1213 = vmatpush1.msra.mxu0 0.0
    %1214 = vmatprep.subr.mxu0 0.0
    %1215 = vmatpush1.msra.mxu0 0.0
    %1216 = vmatprep.subr.mxu0 0.0
    %1217 = vmatpush1.msra.mxu0 0.0
    %1218 = vmatprep.subr.mxu0 0.0
    %1219 = vmatpush1.msra.mxu0 0.0
    %1220 = vmatprep.subr.mxu0 0.0
    %1221 = vmatpush1.msra.mxu0 0.0
    %1222 = vmatprep.subr.mxu0 0.0
    %1223 = vmatpush1.msra.mxu0 0.0
    %1224 = vmatprep.subr.mxu0 0.0
    %1225 = vmatpush1.msra.mxu0 0.0
    %1226 = vmatprep.subr.mxu0 0.0
    %1227 = vmatpush1.msra.mxu0 0.0
    %1228 = vmatprep.mubr.f32.mxu0 0.0
    %1229 = vmatmul.mubr.f32.gmra.mrb[0].mxu0 %v1146
    %v1230 = vpop.f32.mrb[0].mxu0
    %v1231 = vadd.f32 %v1163, %v1230
    %v1232 = vpop.f32.mrb[0].mxu0
    %1233 = vdwg.mxu0
    %v1234 = vmax.f32 %v1231, 0.0
    %v1235 = vld [vmem:[%s17] sm:$0xff]
    %v1236 = vld [vmem:[%s17 + $0x8] sm:$0xff]
    %v1237 = vld [vmem:[%s17 + $0x10] sm:$0xff]
    %v1238 = vld [vmem:[%s17 + $0x18] sm:$0xff]
    %v1239 = vld [vmem:[%s17 + $0x20] sm:$0xff]
    %v1240 = vld [vmem:[%s17 + $0x28] sm:$0xff]
    %v1241 = vld [vmem:[%s17 + $0x30] sm:$0xff]
    %v1242 = vld [vmem:[%s17 + $0x38] sm:$0xff]
    %v1243 = vld [vmem:[%s17 + $0x40] sm:$0xff]
    %v1244 = vld [vmem:[%s17 + $0x48] sm:$0xff]
    %v1245 = vld [vmem:[%s17 + $0x50] sm:$0xff]
    %v1246 = vld [vmem:[%s17 + $0x58] sm:$0xff]
    %v1247 = vld [vmem:[%s17 + $0x60] sm:$0xff]
    %v1248 = vld [vmem:[%s17 + $0x68] sm:$0xff]
    %v1249 = vld [vmem:[%s17 + $0x70] sm:$0xff]
    %v1250 = vld [vmem:[%s17 + $0x78] sm:$0xff]
    %v1251 = vld [vmem:[%s18] sm:$0x1]
    %1252 = vmatprep.subr.mxu0 0.0
    %1253 = vmatpush1.msra.mxu0 %v1235
    %1254 = vmatprep.subr.mxu0 0.0
    %1255 = vmatpush1.msra.mxu0 %v1236
    %1256 = vmatprep.subr.mxu0 0.0
    %1257 = vmatpush1.msra.mxu0 %v1237
    %1258 = vmatprep.subr.mxu0 0.0
    %1259 = vmatpush1.msra.mxu0 %v1238
    %1260 = vmatprep.subr.mxu0 0.0
    %1261 = vmatpush1.msra.mxu0 %v1239
    %1262 = vmatprep.subr.mxu0 0.0
    %1263 = vmatpush1.msra.mxu0 %v1240
    %1264 = vmatprep.subr.mxu0 0.0
    %1265 = vmatpush1.msra.mxu0 %v1241
    %1266 = vmatprep.subr.mxu0 0.0
    %1267 = vmatpush1.msra.mxu0 %v1242
    %1268 = vmatprep.subr.mxu0 0.0
    %1269 = vmatpush1.msra.mxu0 %v1243
    %1270 = vmatprep.subr.mxu0 0.0
    %1271 = vmatpush1.msra.mxu0 %v1244
    %1272 = vmatprep.subr.mxu0 0.0
    %1273 = vmatpush1.msra.mxu0 %v1245
    %1274 = vmatprep.subr.mxu0 0.0
    %1275 = vmatpush1.msra.mxu0 %v1246
    %1276 = vmatprep.subr.mxu0 0.0
    %1277 = vmatpush1.msra.mxu0 %v1247
    %1278 = vmatprep.subr.mxu0 0.0
    %1279 = vmatpush1.msra.mxu0 %v1248
    %1280 = vmatprep.subr.mxu0 0.0
    %1281 = vmatpush1.msra.mxu0 %v1249
    %1282 = vmatprep.subr.mxu0 0.0
    %1283 = vmatpush1.msra.mxu0 %v1250
    %1284 = vmatprep.subr.mxu0 0.0
    %1285 = vmatpush1.msra.mxu0 0.0
    %1286 = vmatprep.subr.mxu0 0.0
    %1287 = vmatpush1.msra.mxu0 0.0
    %1288 = vmatprep.subr.mxu0 0.0
    %1289 = vmatpush1.msra.mxu0 0.0
    %1290 = vmatprep.subr.mxu0 0.0
    %1291 = vmatpush1.msra.mxu0 0.0
    %1292 = vmatprep.subr.mxu0 0.0
    %1293 = vmatpush1.msra.mxu0 0.0
    %1294 = vmatprep.subr.mxu0 0.0
    %1295 = vmatpush1.msra.mxu0 0.0
    %1296 = vmatprep.subr.mxu0 0.0
    %1297 = vmatpush1.msra.mxu0 0.0
    %1298 = vmatprep.subr.mxu0 0.0
    %1299 = vmatpush1.msra.mxu0 0.0
    %1300 = vmatprep.subr.mxu0 0.0
    %1301 = vmatpush1.msra.mxu0 0.0
    %1302 = vmatprep.subr.mxu0 0.0
    %1303 = vmatpush1.msra.mxu0 0.0
    %1304 = vmatprep.subr.mxu0 0.0
    %1305 = vmatpush1.msra.mxu0 0.0
    %1306 = vmatprep.subr.mxu0 0.0
    %1307 = vmatpush1.msra.mxu0 0.0
    %1308 = vmatprep.subr.mxu0 0.0
    %1309 = vmatpush1.msra.mxu0 0.0
    %1310 = vmatprep.subr.mxu0 0.0
    %1311 = vmatpush1.msra.mxu0 0.0
    %1312 = vmatprep.subr.mxu0 0.0
    %1313 = vmatpush1.msra.mxu0 0.0
    %1314 = vmatprep.subr.mxu0 0.0
    %1315 = vmatpush1.msra.mxu0 0.0
    %1316 = vmatprep.mubr.f32.mxu0 0.0
    %1317 = vmatmul.mubr.f32.gmra.mrb[0].mxu0 %v1234
    %v1318 = vpop.f32.mrb[0].mxu0
    %v1319 = vadd.f32 %v1251, %v1318
    %v1320 = vpop.f32.mrb[0].mxu0
    %1321 = vdwg.mxu0
    %1322 = vst [vmem:[#allocation2] sm:$0x1] %v1319
    %v1323 = vld [vmem:[%s2] sm:$0xff]
    %v1324 = vld [vmem:[%s2 + $0x8] sm:$0xff]
    %vm1325 = vcmp.gt.f32.partialorder %v1323, 0.5
    %vm1326 = vcmp.gt.f32.partialorder %v1324, 0.5
    %v1327 = vsel %vm1325, 1, 0
    %v1328 = vsel %vm1326, 1, 0
    %1329 = vset.pattern.permute.xlu0 1
    %1330 = vperm.xlu0 %1329, %v1327
    %v1331 = vpop.permute.xlu0 %1330
    %1332 = vset.pattern.permute.xlu0 1
    %1333 = vperm.xlu0 %1332, %v1328
    %v1334 = vpop.permute.xlu0 %1333
    %vm1335 = vcmp.eq.s32.totalorder %v1331, 1
    %vm1336 = vcmp.eq.s32.totalorder %v1334, 1
    %v1337 = vsel %vm1335, %v1122, -3e+38
    %v1338 = vsel %vm1336, %v1123, -3e+38
    %v1339 = vmax.f32 %v1337, %v1338
    %v1340 = vrot.slane %v1339, 4
    %v1341 = vmax.f32 %v1339, %v1340
    %v1342 = vrot.slane %v1341, 2
    %v1343 = vmax.f32 %v1341, %v1342
    %v1344 = vrot.slane %v1343, 1
    %v1345 = vmax.f32 %v1343, %v1344
    %v1346 = vld [vmem:[%s15] sm:$0xff]
    %v1347 = vld [vmem:[%s15 + $0x8] sm:$0xff]
    %v1348 = vld [vmem:[%s15 + $0x10] sm:$0xff]
    %v1349 = vld [vmem:[%s15 + $0x18] sm:$0xff]
    %v1350 = vld [vmem:[%s15 + $0x20] sm:$0xff]
    %v1351 = vld [vmem:[%s15 + $0x28] sm:$0xff]
    %v1352 = vld [vmem:[%s15 + $0x30] sm:$0xff]
    %v1353 = vld [vmem:[%s15 + $0x38] sm:$0xff]
    %v1354 = vld [vmem:[%s15 + $0x40] sm:$0xff]
    %v1355 = vld [vmem:[%s15 + $0x48] sm:$0xff]
    %v1356 = vld [vmem:[%s15 + $0x50] sm:$0xff]
    %v1357 = vld [vmem:[%s15 + $0x58] sm:$0xff]
    %v1358 = vld [vmem:[%s15 + $0x60] sm:$0xff]
    %v1359 = vld [vmem:[%s15 + $0x68] sm:$0xff]
    %v1360 = vld [vmem:[%s15 + $0x70] sm:$0xff]
    %v1361 = vld [vmem:[%s15 + $0x78] sm:$0xff]
    %v1362 = vld [vmem:[%s16] sm:$0x1]
    %1363 = vmatprep.subr.mxu0 0.0
    %1364 = vmatpush1.msra.mxu0 %v1346
    %1365 = vmatprep.subr.mxu0 0.0
    %1366 = vmatpush1.msra.mxu0 %v1347
    %1367 = vmatprep.subr.mxu0 0.0
    %1368 = vmatpush1.msra.mxu0 %v1348
    %1369 = vmatprep.subr.mxu0 0.0
    %1370 = vmatpush1.msra.mxu0 %v1349
    %1371 = vmatprep.subr.mxu0 0.0
    %1372 = vmatpush1.msra.mxu0 %v1350
    %1373 = vmatprep.subr.mxu0 0.0
    %1374 = vmatpush1.msra.mxu0 %v1351
    %1375 = vmatprep.subr.mxu0 0.0
    %1376 = vmatpush1.msra.mxu0 %v1352
    %1377 = vmatprep.subr.mxu0 0.0
    %1378 = vmatpush1.msra.mxu0 %v1353
    %1379 = vmatprep.subr.mxu0 0.0
    %1380 = vmatpush1.msra.mxu0 %v1354
    %1381 = vmatprep.subr.mxu0 0.0
    %1382 = vmatpush1.msra.mxu0 %v1355
    %1383 = vmatprep.subr.mxu0 0.0
    %1384 = vmatpush1.msra.mxu0 %v1356
    %1385 = vmatprep.subr.mxu0 0.0
    %1386 = vmatpush1.msra.mxu0 %v1357
    %1387 = vmatprep.subr.mxu0 0.0
    %1388 = vmatpush1.msra.mxu0 %v1358
    %1389 = vmatprep.subr.mxu0 0.0
    %1390 = vmatpush1.msra.mxu0 %v1359
    %1391 = vmatprep.subr.mxu0 0.0
    %1392 = vmatpush1.msra.mxu0 %v1360
    %1393 = vmatprep.subr.mxu0 0.0
    %1394 = vmatpush1.msra.mxu0 %v1361
    %1395 = vmatprep.subr.mxu0 0.0
    %1396 = vmatpush1.msra.mxu0 0.0
    %1397 = vmatprep.subr.mxu0 0.0
    %1398 = vmatpush1.msra.mxu0 0.0
    %1399 = vmatprep.subr.mxu0 0.0
    %1400 = vmatpush1.msra.mxu0 0.0
    %1401 = vmatprep.subr.mxu0 0.0
    %1402 = vmatpush1.msra.mxu0 0.0
    %1403 = vmatprep.subr.mxu0 0.0
    %1404 = vmatpush1.msra.mxu0 0.0
    %1405 = vmatprep.subr.mxu0 0.0
    %1406 = vmatpush1.msra.mxu0 0.0
    %1407 = vmatprep.subr.mxu0 0.0
    %1408 = vmatpush1.msra.mxu0 0.0
    %1409 = vmatprep.subr.mxu0 0.0
    %1410 = vmatpush1.msra.mxu0 0.0
    %1411 = vmatprep.subr.mxu0 0.0
    %1412 = vmatpush1.msra.mxu0 0.0
    %1413 = vmatprep.subr.mxu0 0.0
    %1414 = vmatpush1.msra.mxu0 0.0
    %1415 = vmatprep.subr.mxu0 0.0
    %1416 = vmatpush1.msra.mxu0 0.0
    %1417 = vmatprep.subr.mxu0 0.0
    %1418 = vmatpush1.msra.mxu0 0.0
    %1419 = vmatprep.subr.mxu0 0.0
    %1420 = vmatpush1.msra.mxu0 0.0
    %1421 = vmatprep.subr.mxu0 0.0
    %1422 = vmatpush1.msra.mxu0 0.0
    %1423 = vmatprep.subr.mxu0 0.0
    %1424 = vmatpush1.msra.mxu0 0.0
    %1425 = vmatprep.subr.mxu0 0.0
    %1426 = vmatpush1.msra.mxu0 0.0
    %1427 = vmatprep.mubr.f32.mxu0 0.0
    %1428 = vmatmul.mubr.f32.gmra.mrb[0].mxu0 %v1345
    %v1429 = vpop.f32.mrb[0].mxu0
    %v1430 = vadd.f32 %v1362, %v1429
    %v1431 = vpop.f32.mrb[0].mxu0
    %1432 = vdwg.mxu0
    %v1433 = vmax.f32 %v1430, 0.0
    %v1434 = vld [vmem:[%s17] sm:$0xff]
    %v1435 = vld [vmem:[%s17 + $0x8] sm:$0xff]
    %v1436 = vld [vmem:[%s17 + $0x10] sm:$0xff]
    %v1437 = vld [vmem:[%s17 + $0x18] sm:$0xff]
    %v1438 = vld [vmem:[%s17 + $0x20] sm:$0xff]
    %v1439 = vld [vmem:[%s17 + $0x28] sm:$0xff]
    %v1440 = vld [vmem:[%s17 + $0x30] sm:$0xff]
    %v1441 = vld [vmem:[%s17 + $0x38] sm:$0xff]
    %v1442 = vld [vmem:[%s17 + $0x40] sm:$0xff]
    %v1443 = vld [vmem:[%s17 + $0x48] sm:$0xff]
    %v1444 = vld [vmem:[%s17 + $0x50] sm:$0xff]
    %v1445 = vld [vmem:[%s17 + $0x58] sm:$0xff]
    %v1446 = vld [vmem:[%s17 + $0x60] sm:$0xff]
    %v1447 = vld [vmem:[%s17 + $0x68] sm:$0xff]
    %v1448 = vld [vmem:[%s17 + $0x70] sm:$0xff]
    %v1449 = vld [vmem:[%s17 + $0x78] sm:$0xff]
    %v1450 = vld [vmem:[%s18] sm:$0x1]
    %1451 = vmatprep.subr.mxu0 0.0
    %1452 = vmatpush1.msra.mxu0 %v1434
    %1453 = vmatprep.subr.mxu0 0.0
    %1454 = vmatpush1.msra.mxu0 %v1435
    %1455 = vmatprep.subr.mxu0 0.0
    %1456 = vmatpush1.msra.mxu0 %v1436
    %1457 = vmatprep.subr.mxu0 0.0
    %1458 = vmatpush1.msra.mxu0 %v1437
    %1459 = vmatprep.subr.mxu0 0.0
    %1460 = vmatpush1.msra.mxu0 %v1438
    %1461 = vmatprep.subr.mxu0 0.0
    %1462 = vmatpush1.msra.mxu0 %v1439
    %1463 = vmatprep.subr.mxu0 0.0
    %1464 = vmatpush1.msra.mxu0 %v1440
    %1465 = vmatprep.subr.mxu0 0.0
    %1466 = vmatpush1.msra.mxu0 %v1441
    %1467 = vmatprep.subr.mxu0 0.0
    %1468 = vmatpush1.msra.mxu0 %v1442
    %1469 = vmatprep.subr.mxu0 0.0
    %1470 = vmatpush1.msra.mxu0 %v1443
    %1471 = vmatprep.subr.mxu0 0.0
    %1472 = vmatpush1.msra.mxu0 %v1444
    %1473 = vmatprep.subr.mxu0 0.0
    %1474 = vmatpush1.msra.mxu0 %v1445
    %1475 = vmatprep.subr.mxu0 0.0
    %1476 = vmatpush1.msra.mxu0 %v1446
    %1477 = vmatprep.subr.mxu0 0.0
    %1478 = vmatpush1.msra.mxu0 %v1447
    %1479 = vmatprep.subr.mxu0 0.0
    %1480 = vmatpush1.msra.mxu0 %v1448
    %1481 = vmatprep.subr.mxu0 0.0
    %1482 = vmatpush1.msra.mxu0 %v1449
    %1483 = vmatprep.subr.mxu0 0.0
    %1484 = vmatpush1.msra.mxu0 0.0
    %1485 = vmatprep.subr.mxu0 0.0
    %1486 = vmatpush1.msra.mxu0 0.0
    %1487 = vmatprep.subr.mxu0 0.0
    %1488 = vmatpush1.msra.mxu0 0.0
    %1489 = vmatprep.subr.mxu0 0.0
    %1490 = vmatpush1.msra.mxu0 0.0
    %1491 = vmatprep.subr.mxu0 0.0
    %1492 = vmatpush1.msra.mxu0 0.0
    %1493 = vmatprep.subr.mxu0 0.0
    %1494 = vmatpush1.msra.mxu0 0.0
    %1495 = vmatprep.subr.mxu0 0.0
    %1496 = vmatpush1.msra.mxu0 0.0
    %1497 = vmatprep.subr.mxu0 0.0
    %1498 = vmatpush1.msra.mxu0 0.0
    %1499 = vmatprep.subr.mxu0 0.0
    %1500 = vmatpush1.msra.mxu0 0.0
    %1501 = vmatprep.subr.mxu0 0.0
    %1502 = vmatpush1.msra.mxu0 0.0
    %1503 = vmatprep.subr.mxu0 0.0
    %1504 = vmatpush1.msra.mxu0 0.0
    %1505 = vmatprep.subr.mxu0 0.0
    %1506 = vmatpush1.msra.mxu0 0.0
    %1507 = vmatprep.subr.mxu0 0.0
    %1508 = vmatpush1.msra.mxu0 0.0
    %1509 = vmatprep.subr.mxu0 0.0
    %1510 = vmatpush1.msra.mxu0 0.0
    %1511 = vmatprep.subr.mxu0 0.0
    %1512 = vmatpush1.msra.mxu0 0.0
    %1513 = vmatprep.subr.mxu0 0.0
    %1514 = vmatpush1.msra.mxu0 0.0
    %1515 = vmatprep.mubr.f32.mxu0 0.0
    %1516 = vmatmul.mubr.f32.gmra.mrb[0].mxu0 %v1433
    %v1517 = vpop.f32.mrb[0].mxu0
    %v1518 = vadd.f32 %v1450, %v1517
    %v1519 = vpop.f32.mrb[0].mxu0
    %1520 = vdwg.mxu0
    %1521 = vst [vmem:[#allocation2 + $0x1] sm:$0x1] %v1518
    // Predicated region
    $region78: #{gcn_forward.1} parent=1 // pred_check
      _
    $region79: #{gcn_forward.1} parent=1 // pred_check_branch
      %1523 = sbr.rel (0) target = $region81
    $region80: #{gcn_forward.1} parent=1 // pred_region
      %s1525 = ssub.s32 32, 32
      %1526 = vsyncadd [#allocation3], %s1525
      %s1528 = sshll.u32 [#allocation2], 4
      %s1529 = int_to_ptr.vmem [resolvable:$true] %s1528
      %1531 = dma.vmem_to_hbm [thread:$0]  %s1529, 32, %s19, [#allocation3]
    $region81: #{gcn_forward.1} parent=1 // pred_fallthru
      _
    // Predicated region
    $region82: #{gcn_forward.1} parent=1 // pred_check
      _
    $region83: #{gcn_forward.1} parent=1 // pred_check_branch
      %1533 = sbr.rel (0) target = $region85
    $region84: #{gcn_forward.1} parent=1 // pred_region
      %1534 = dma.done [#allocation3], 32
    $region85: #{gcn_forward.1} parent=1 // pred_fallthru
      _
    %1535 = vsyncpa [#allocation3], 1

</llo_original>
